<compile_context>
chip_gen: v6e
topology: v6e:2x2x1
jax: 0.10.0
libtpu: 0.0.40
codegen_flags: <defaults>
</compile_context>

<pallas_src>
import functools

import jax
import jax.numpy as jnp
from jax.experimental import pallas as pl
from jax.experimental.pallas import tpu as pltpu

MAX_M_TILE = 256     # batch tile: fills the 256-row MXU on v6e/v7x (2x128 on v5e)
MIN_M_ALIGN = 16     # bf16 sublane packing (16 rows per vreg)
HEAD_WIDTH = 128     # lane-dense merged mu/kappa head width


def _round_up(n, m):
    return ((n + m - 1) // m) * m


def _batch_tiling(B):
    """Return (m_tile, padded_batch)."""
    Bp = _round_up(max(B, 1), MIN_M_ALIGN)
    if Bp <= MAX_M_TILE:
        return Bp, Bp                       # single tile, grid = 1
    Mp = _round_up(B, MAX_M_TILE)
    return MAX_M_TILE, Mp                   # grid >= 2 once B > MAX_M_TILE


def _pad_rows(a, Mp):
    B = a.shape[0]
    if B == Mp:
        return a
    return jnp.pad(a, ((0, Mp - B), (0, 0)))


# ----------------------------------------------------------------------------
# Shared in-kernel compute blocks (bf16 MXU inputs, f32 accumulation)
# ----------------------------------------------------------------------------
def _encode_block(x_bf, w1, b1, wh, bh, latent_dim):
    """x_bf: (M, in_dim) bf16.

    Returns:
      mu_full:   (M, 128) f32, L2-normalized mu in lanes [0, latent), zeros after.
      heads_out: (M, 128) f32, mu in lanes [0, latent), kappa in lane latent, zeros after.
    """
    h = jnp.dot(x_bf.astype(jnp.bfloat16), w1,
                preferred_element_type=jnp.float32) + b1
    h = jnp.maximum(h, 0.0)
    heads = jnp.dot(h.astype(jnp.bfloat16), wh,
                    preferred_element_type=jnp.float32) + bh
    lane = jax.lax.broadcasted_iota(jnp.int32, heads.shape, 1)
    mu_raw = jnp.where(lane < latent_dim, heads, 0.0)
    inv = jax.lax.rsqrt(jnp.sum(mu_raw * mu_raw, axis=-1, keepdims=True) + 1e-12)
    mu_full = mu_raw * inv
    # kappa head: extract the single kappa lane (XLU lane-reduce) and run the
    # softplus on the narrow (M, 1) column only.
    k_col = jnp.sum(jnp.where(lane == latent_dim, heads, 0.0),
                    axis=-1, keepdims=True)
    kappa = jnp.logaddexp(k_col, 0.0) + 1.0          # softplus + 1
    heads_out = jnp.where(lane < latent_dim, mu_full,
                          jnp.where(lane == latent_dim, kappa, 0.0))
    return mu_full, heads_out


def _decode_block(z_full, wd1, bd1, wd2, bd2):
    """z_full: (M, 128) f32 latent padded to 128 lanes (zeros past latent_dim)."""
    hd = jnp.dot(z_full.astype(jnp.bfloat16), wd1,
                 preferred_element_type=jnp.float32) + bd1
    hd = jnp.maximum(hd, 0.0)
    out = jnp.dot(hd.astype(jnp.bfloat16), wd2,
                  preferred_element_type=jnp.float32) + bd2
    return jnp.exp(out)


# ----------------------------------------------------------------------------
# Kernels
# ----------------------------------------------------------------------------
def _forward_kernel(x_ref, w1_ref, b1_ref, wh_ref, bh_ref,
                    wd1_ref, bd1_ref, wd2_ref, bd2_ref,
                    recon_ref, heads_ref, *, latent_dim):
    mu_full, heads_out = _encode_block(
        x_ref[...], w1_ref[...], b1_ref[...], wh_ref[...], bh_ref[...],
        latent_dim)
    # sample(mu, kappa): deterministic mean direction (TODO(synk): vMF sampling)
    recon = _decode_block(mu_full, wd1_ref[...], bd1_ref[...],
                          wd2_ref[...], bd2_ref[...])
    recon_ref[...] = recon.astype(recon_ref.dtype)
    heads_ref[...] = heads_out.astype(heads_ref.dtype)


def _encode_kernel(x_ref, w1_ref, b1_ref, wh_ref, bh_ref, heads_ref,
                   *, latent_dim):
    _, heads_out = _encode_block(x_ref[...], w1_ref[...], b1_ref[...],
                                 wh_ref[...], bh_ref[...], latent_dim)
    heads_ref[...] = heads_out.astype(heads_ref.dtype)


def _decode_kernel(z_ref, wd1_ref, bd1_ref, wd2_ref, bd2_ref, recon_ref):
    recon = _decode_block(z_ref[...], wd1_ref[...], bd1_ref[...],
                          wd2_ref[...], bd2_ref[...])
    recon_ref[...] = recon.astype(recon_ref.dtype)


# ----------------------------------------------------------------------------
# pallas_call wrappers
# ----------------------------------------------------------------------------
@functools.partial(jax.jit, static_argnums=(2,))
def fused_forward(x_flat, prep, latent_dim):
    B, in_dim = x_flat.shape
    hidden = prep["w1"].shape[1]
    m_tile, Mp = _batch_tiling(B)
    xp = _pad_rows(x_flat.astype(jnp.bfloat16), Mp)

    kern = functools.partial(_forward_kernel, latent_dim=latent_dim)
    recon, heads = pl.pallas_call(
        kern,
        out_shape=(jax.ShapeDtypeStruct((Mp, in_dim), jnp.float32),
                   jax.ShapeDtypeStruct((Mp, HEAD_WIDTH), jnp.float32)),
        grid=(Mp // m_tile,),
        in_specs=[
            pl.BlockSpec((m_tile, in_dim), lambda i: (i, 0)),
            pl.BlockSpec((in_dim, hidden), lambda i: (0, 0)),
            pl.BlockSpec((1, hidden), lambda i: (0, 0)),
            pl.BlockSpec((hidden, HEAD_WIDTH), lambda i: (0, 0)),
            pl.BlockSpec((1, HEAD_WIDTH), lambda i: (0, 0)),
            pl.BlockSpec((HEAD_WIDTH, hidden), lambda i: (0, 0)),
            pl.BlockSpec((1, hidden), lambda i: (0, 0)),
            pl.BlockSpec((hidden, in_dim), lambda i: (0, 0)),
            pl.BlockSpec((1, in_dim), lambda i: (0, 0)),
        ],
        out_specs=[
            pl.BlockSpec((m_tile, in_dim), lambda i: (i, 0)),
            pl.BlockSpec((m_tile, HEAD_WIDTH), lambda i: (i, 0)),
        ],
        compiler_params=pltpu.CompilerParams(
            dimension_semantics=("parallel",)),
    )(xp, prep["w1"], prep["b1"], prep["wh"], prep["bh"],
      prep["wd1"], prep["bd1"], prep["wd2"], prep["bd2"])
    return recon[:B], heads[:B]


@functools.partial(jax.jit, static_argnums=(2,))
def encode_call(x_flat, prep, latent_dim):
    B, in_dim = x_flat.shape
    hidden = prep["w1"].shape[1]
    m_tile, Mp = _batch_tiling(B)
    xp = _pad_rows(x_flat.astype(jnp.bfloat16), Mp)

    kern = functools.partial(_encode_kernel, latent_dim=latent_dim)
    heads = pl.pallas_call(
        kern,
        out_shape=jax.ShapeDtypeStruct((Mp, HEAD_WIDTH), jnp.float32),
        grid=(Mp // m_tile,),
        in_specs=[
            pl.BlockSpec((m_tile, in_dim), lambda i: (i, 0)),
            pl.BlockSpec((in_dim, hidden), lambda i: (0, 0)),
            pl.BlockSpec((1, hidden), lambda i: (0, 0)),
            pl.BlockSpec((hidden, HEAD_WIDTH), lambda i: (0, 0)),
            pl.BlockSpec((1, HEAD_WIDTH), lambda i: (0, 0)),
        ],
        out_specs=pl.BlockSpec((m_tile, HEAD_WIDTH), lambda i: (i, 0)),
        compiler_params=pltpu.CompilerParams(
            dimension_semantics=("parallel",)),
    )(xp, prep["w1"], prep["b1"], prep["wh"], prep["bh"])
    return heads[:B]


@jax.jit
def decode_call(z, prep):
    B, latent = z.shape
    hidden = prep["wd1"].shape[1]
    in_dim = prep["wd2"].shape[1]
    m_tile, Mp = _batch_tiling(B)
    # z is tiny (B x latent); pad it into a 128-lane-dense slab.  Rows/lanes
    # past latent_dim hit zero rows of wd1, so any padding value is inert.
    zp = jnp.zeros((Mp, HEAD_WIDTH), jnp.float32).at[:B, :latent].set(
        z.astype(jnp.float32))

    recon = pl.pallas_call(
        _decode_kernel,
        out_shape=jax.ShapeDtypeStruct((Mp, in_dim), jnp.float32),
        grid=(Mp // m_tile,),
        in_specs=[
            pl.BlockSpec((m_tile, HEAD_WIDTH), lambda i: (i, 0)),
            pl.BlockSpec((HEAD_WIDTH, hidden), lambda i: (0, 0)),
            pl.BlockSpec((1, hidden), lambda i: (0, 0)),
            pl.BlockSpec((hidden, in_dim), lambda i: (0, 0)),
            pl.BlockSpec((1, in_dim), lambda i: (0, 0)),
        ],
        out_specs=pl.BlockSpec((m_tile, in_dim), lambda i: (i, 0)),
        compiler_params=pltpu.CompilerParams(
            dimension_semantics=("parallel",)),
    )(zp, prep["wd1"], prep["bd1"], prep["wd2"], prep["bd2"])
    return recon[:B]


# ----------------------------------------------------------------------------
# Parameters
# ----------------------------------------------------------------------------
def init_params(key, in_dim, hidden_dim, latent_dim):
    ks = jax.random.split(key, 5)

    def dense(k, fan_in, fan_out):
        scale = 1.0 / jnp.sqrt(jnp.float32(fan_in))
        w = jax.random.uniform(k, (fan_in, fan_out), jnp.float32, -scale, scale)
        b = jnp.zeros((fan_out,), jnp.float32)
        return w, b

    return {
        "enc1": dense(ks[0], in_dim, hidden_dim),
        "mu": dense(ks[1], hidden_dim, latent_dim),
        "kappa": dense(ks[2], hidden_dim, 1),
        "dec1": dense(ks[3], latent_dim, hidden_dim),
        "dec2": dense(ks[4], hidden_dim, in_dim),
    }


def prepare_params(params):
    """Merge mu/kappa heads (lane-padded to 128), zero-pad decoder input weight,
    cast weights to bf16 (f32 biases)."""
    w1, b1 = params["enc1"]
    wmu, bmu = params["mu"]
    wk, bk = params["kappa"]
    wd1, bd1 = params["dec1"]
    wd2, bd2 = params["dec2"]
    hidden_dim = w1.shape[1]
    latent_dim = wmu.shape[1]
    assert latent_dim + 1 <= HEAD_WIDTH

    wh = jnp.zeros((hidden_dim, HEAD_WIDTH), jnp.float32)
    wh = wh.at[:, :latent_dim].set(wmu).at[:, latent_dim:latent_dim + 1].set(wk)
    bh = jnp.zeros((HEAD_WIDTH,), jnp.float32)
    bh = bh.at[:latent_dim].set(bmu).at[latent_dim].set(bk[0])

    wd1p = jnp.zeros((HEAD_WIDTH, hidden_dim), jnp.float32).at[:latent_dim].set(wd1)

    return {
        "w1": w1.astype(jnp.bfloat16),
        "b1": b1.reshape(1, -1).astype(jnp.float32),
        "wh": wh.astype(jnp.bfloat16),
        "bh": bh.reshape(1, -1).astype(jnp.float32),
        "wd1": wd1p.astype(jnp.bfloat16),
        "bd1": bd1.reshape(1, -1).astype(jnp.float32),
        "wd2": wd2.astype(jnp.bfloat16),
        "bd2": bd2.reshape(1, -1).astype(jnp.float32),
    }


# ----------------------------------------------------------------------------
# Model wrapper (mirrors the PyTorch Model API)
# ----------------------------------------------------------------------------
class PallasSVAE:
    def __init__(self, params, img_shape, latent_dim):
        self.img_shape = img_shape          # (C, H, W)
        self.latent_dim = latent_dim
        self.prep = prepare_params(params)

    def encode(self, x_flat):
        heads = encode_call(x_flat, self.prep, self.latent_dim)
        mu = heads[:, :self.latent_dim]
        kappa = heads[:, self.latent_dim:self.latent_dim + 1]
        return mu, kappa

    def sample(self, mu, kappa):
        # TODO(synk): real vMF rejection sampling; deterministic mean direction.
        return mu

    def decode_exp(self, z):
        return decode_call(z, self.prep)

    def forward(self, x):
        B = x.shape[0]
        x_flat = x.reshape(B, -1)
        recon_flat, heads = fused_forward(x_flat, self.prep, self.latent_dim)
        mu = heads[:, :self.latent_dim]
        kappa = heads[:, self.latent_dim:self.latent_dim + 1]
        recon = recon_flat.reshape((B,) + self.img_shape)
        return recon, mu, kappa

    def __call__(self, x):
        return self.forward(x)


# ----------------------------------------------------------------------------
# Main
# ----------------------------------------------------------------------------
if __name__ == "__main__":
    B, C, H, W = 2, 4, 16, 16
    hidden_dim = 128
    latent_dim = 32
    in_dim = C * H * W

    key = jax.random.PRNGKey(0)
    k_param, k_x = jax.random.split(key)

    params = init_params(k_param, in_dim, hidden_dim, latent_dim)
    model = PallasSVAE(params, (C, H, W), latent_dim)

    x = jax.random.normal(k_x, (B, C, H, W), jnp.float32)

    recon, mu, kappa = model(x)
    jax.block_until_ready((recon, mu, kappa))

    assert recon.shape == (B, C, H, W)
    assert mu.shape == (B, latent_dim)
    assert kappa.shape == (B, 1)
    assert bool(jnp.all(jnp.isfinite(recon)))
    norms = jnp.linalg.norm(mu, axis=-1)
    assert bool(jnp.all(jnp.abs(norms - 1.0) < 1e-4))

    # API-compat path: decode_exp(sample(encode(x))) matches fused forward.
    x_flat = x.reshape(B, -1)
    mu2, kappa2 = model.encode(x_flat)
    recon2 = model.decode_exp(model.sample(mu2, kappa2)).reshape(B, C, H, W)
    jax.block_until_ready((recon2, mu2, kappa2))
    assert bool(jnp.allclose(mu2, mu, atol=1e-5))
    assert bool(jnp.allclose(kappa2, kappa, atol=1e-5))
    assert bool(jnp.allclose(recon2, recon, atol=1e-4, rtol=1e-4))

    print("KERNEL_OK")
</pallas_src>

<mosaic_0001>
module attributes {stable_mosaic.version = 11 : i64} {
  func.func @_forward_kernel(%arg0: i32, %arg1: memref<16x1024xbf16, #tpu.memory_space<vmem>>, %arg2: memref<1024x128xbf16, #tpu.memory_space<vmem>>, %arg3: memref<1x128xf32, #tpu.memory_space<vmem>>, %arg4: memref<128x128xbf16, #tpu.memory_space<vmem>>, %arg5: memref<1x128xf32, #tpu.memory_space<vmem>>, %arg6: memref<128x128xbf16, #tpu.memory_space<vmem>>, %arg7: memref<1x128xf32, #tpu.memory_space<vmem>>, %arg8: memref<128x1024xbf16, #tpu.memory_space<vmem>>, %arg9: memref<1x1024xf32, #tpu.memory_space<vmem>>, %arg10: memref<16x1024xf32, #tpu.memory_space<vmem>>, %arg11: memref<16x128xf32, #tpu.memory_space<vmem>>) attributes {dimension_semantics = [#tpu.dimension_semantics<parallel>], iteration_bounds = array<i64: 1>, scalar_prefetch = 0 : i64, scratch_operands = 0 : i64, tpu.core_type = #tpu.core_type<tc>, window_params = [{transform_indices = @transform_0, window_bounds = array<i64: 16, 1024>}, {pipeline_mode = #tpu.pipeline_mode<synchronous>, transform_indices = @transform_1, window_bounds = array<i64: 1024, 128>}, {pipeline_mode = #tpu.pipeline_mode<synchronous>, transform_indices = @transform_2, window_bounds = array<i64: 1, 128>}, {pipeline_mode = #tpu.pipeline_mode<synchronous>, transform_indices = @transform_3, window_bounds = array<i64: 128, 128>}, {pipeline_mode = #tpu.pipeline_mode<synchronous>, transform_indices = @transform_4, window_bounds = array<i64: 1, 128>}, {pipeline_mode = #tpu.pipeline_mode<synchronous>, transform_indices = @transform_5, window_bounds = array<i64: 128, 128>}, {pipeline_mode = #tpu.pipeline_mode<synchronous>, transform_indices = @transform_6, window_bounds = array<i64: 1, 128>}, {pipeline_mode = #tpu.pipeline_mode<synchronous>, transform_indices = @transform_7, window_bounds = array<i64: 128, 1024>}, {pipeline_mode = #tpu.pipeline_mode<synchronous>, transform_indices = @transform_8, window_bounds = array<i64: 1, 1024>}, {transform_indices = @transform_9, window_bounds = array<i64: 16, 1024>}, {transform_indices = @transform_10, window_bounds = array<i64: 16, 128>}]} {
    %c0 = arith.constant 0 : index
    %c0_0 = arith.constant 0 : index
    %0 = vector.load %arg1[%c0, %c0_0] : memref<16x1024xbf16, #tpu.memory_space<vmem>>, vector<16x1024xbf16>
    %c0_1 = arith.constant 0 : index
    %c0_2 = arith.constant 0 : index
    %1 = vector.load %arg2[%c0_1, %c0_2] : memref<1024x128xbf16, #tpu.memory_space<vmem>>, vector<1024x128xbf16>
    %c0_3 = arith.constant 0 : index
    %c0_4 = arith.constant 0 : index
    %2 = vector.load %arg3[%c0_3, %c0_4] : memref<1x128xf32, #tpu.memory_space<vmem>>, vector<1x128xf32>
    %c0_5 = arith.constant 0 : index
    %c0_6 = arith.constant 0 : index
    %3 = vector.load %arg4[%c0_5, %c0_6] : memref<128x128xbf16, #tpu.memory_space<vmem>>, vector<128x128xbf16>
    %c0_7 = arith.constant 0 : index
    %c0_8 = arith.constant 0 : index
    %4 = vector.load %arg5[%c0_7, %c0_8] : memref<1x128xf32, #tpu.memory_space<vmem>>, vector<1x128xf32>
    %cst = arith.constant dense<0.000000e+00> : vector<16x128xf32>
    %5 = tpu.matmul %0, %1, %cst {dimension_numbers = #tpu.dot_dimension_numbers<[1], [0], [0], [1], [0, 0, 1, 1], [], []>} : vector<16x1024xbf16>, vector<1024x128xbf16>, vector<16x128xf32> -> vector<16x128xf32>
    %6 = vector.broadcast %2 : vector<1x128xf32> to vector<16x128xf32>
    %7 = arith.addf %5, %6 : vector<16x128xf32>
    %cst_9 = arith.constant 0.000000e+00 : f32
    %8 = vector.broadcast %cst_9 : f32 to vector<16x128xf32>
    %9 = arith.maximumf %7, %8 : vector<16x128xf32>
    %10 = arith.truncf %9 : vector<16x128xf32> to vector<16x128xbf16>
    %cst_10 = arith.constant dense<0.000000e+00> : vector<16x128xf32>
    %11 = tpu.matmul %10, %3, %cst_10 {dimension_numbers = #tpu.dot_dimension_numbers<[1], [0], [0], [1], [0, 0, 1, 1], [], []>} : vector<16x128xbf16>, vector<128x128xbf16>, vector<16x128xf32> -> vector<16x128xf32>
    %12 = vector.broadcast %4 : vector<1x128xf32> to vector<16x128xf32>
    %13 = arith.addf %11, %12 : vector<16x128xf32>
    %14 = tpu.iota {dimensions = array<i32: 1>} : vector<16x128xi32>
    %c32_i32 = arith.constant 32 : i32
    %15 = vector.broadcast %c32_i32 : i32 to vector<16x128xi32>
    %16 = arith.cmpi slt, %14, %15 : vector<16x128xi32>
    %cst_11 = arith.constant 0.000000e+00 : f32
    %17 = vector.broadcast %cst_11 : f32 to vector<16x128xf32>
    %18 = arith.select %16, %13, %17 : vector<16x128xi1>, vector<16x128xf32>
    %19 = arith.mulf %18, %18 : vector<16x128xf32>
    %cst_12 = arith.constant dense<0.000000e+00> : vector<16xf32>
    %20 = vector.multi_reduction <add>, %19, %cst_12 [1] : vector<16x128xf32> to vector<16xf32>
    %21 = vector.shape_cast %20 : vector<16xf32> to vector<16x1xf32>
    %cst_13 = arith.constant 9.99999996E-13 : f32
    %22 = vector.broadcast %cst_13 : f32 to vector<16x1xf32>
    %23 = arith.addf %21, %22 : vector<16x1xf32>
    %24 = math.rsqrt %23 : vector<16x1xf32>
    %25 = vector.broadcast %24 : vector<16x1xf32> to vector<16x128xf32>
    %26 = arith.mulf %18, %25 : vector<16x128xf32>
    %c32_i32_14 = arith.constant 32 : i32
    %27 = vector.broadcast %c32_i32_14 : i32 to vector<16x128xi32>
    %28 = arith.cmpi eq, %14, %27 : vector<16x128xi32>
    %cst_15 = arith.constant 0.000000e+00 : f32
    %29 = vector.broadcast %cst_15 : f32 to vector<16x128xf32>
    %30 = arith.select %28, %13, %29 : vector<16x128xi1>, vector<16x128xf32>
    %cst_16 = arith.constant dense<0.000000e+00> : vector<16xf32>
    %31 = vector.multi_reduction <add>, %30, %cst_16 [1] : vector<16x128xf32> to vector<16xf32>
    %32 = vector.shape_cast %31 : vector<16xf32> to vector<16x1xf32>
    %cst_17 = arith.constant 0.000000e+00 : f32
    %33 = vector.broadcast %cst_17 : f32 to vector<16x1xf32>
    %34 = arith.maximumf %32, %33 : vector<16x1xf32>
    %35 = vector.broadcast %cst_17 : f32 to vector<16x1xf32>
    %36 = arith.subf %32, %35 : vector<16x1xf32>
    %37 = arith.cmpf one, %36, %36 : vector<16x1xf32>
    %38 = vector.broadcast %cst_17 : f32 to vector<16x1xf32>
    %39 = arith.addf %32, %38 : vector<16x1xf32>
    %40 = math.absf %36 : vector<16x1xf32>
    %cst_18 = arith.constant 0.000000e+00 : f32
    %41 = vector.broadcast %cst_18 : f32 to vector<16x1xf32>
    %42 = arith.subf %41, %40 : vector<16x1xf32>
    %43 = math.exp %42 : vector<16x1xf32>
    %44 = math.log1p %43 : vector<16x1xf32>
    %45 = arith.addf %34, %44 : vector<16x1xf32>
    %46 = arith.select %37, %39, %45 : vector<16x1xi1>, vector<16x1xf32>
    %cst_19 = arith.constant 1.000000e+00 : f32
    %47 = vector.broadcast %cst_19 : f32 to vector<16x1xf32>
    %48 = arith.addf %46, %47 : vector<16x1xf32>
    %c32_i32_20 = arith.constant 32 : i32
    %49 = vector.broadcast %c32_i32_20 : i32 to vector<16x128xi32>
    %50 = arith.cmpi slt, %14, %49 : vector<16x128xi32>
    %c32_i32_21 = arith.constant 32 : i32
    %51 = vector.broadcast %c32_i32_21 : i32 to vector<16x128xi32>
    %52 = arith.cmpi eq, %14, %51 : vector<16x128xi32>
    %cst_22 = arith.constant 0.000000e+00 : f32
    %53 = vector.shape_cast %48 : vector<16x1xf32> to vector<16x1xf32>
    %54 = vector.broadcast %53 : vector<16x1xf32> to vector<16x128xf32>
    %55 = vector.broadcast %cst_22 : f32 to vector<16x128xf32>
    %56 = arith.select %52, %54, %55 : vector<16x128xi1>, vector<16x128xf32>
    %57 = arith.select %50, %26, %56 : vector<16x128xi1>, vector<16x128xf32>
    %c0_23 = arith.constant 0 : index
    %c0_24 = arith.constant 0 : index
    %58 = vector.load %arg6[%c0_23, %c0_24] : memref<128x128xbf16, #tpu.memory_space<vmem>>, vector<128x128xbf16>
    %c0_25 = arith.constant 0 : index
    %c0_26 = arith.constant 0 : index
    %59 = vector.load %arg7[%c0_25, %c0_26] : memref<1x128xf32, #tpu.memory_space<vmem>>, vector<1x128xf32>
    %c0_27 = arith.constant 0 : index
    %c0_28 = arith.constant 0 : index
    %60 = vector.load %arg8[%c0_27, %c0_28] : memref<128x1024xbf16, #tpu.memory_space<vmem>>, vector<128x1024xbf16>
    %c0_29 = arith.constant 0 : index
    %c0_30 = arith.constant 0 : index
    %61 = vector.load %arg9[%c0_29, %c0_30] : memref<1x1024xf32, #tpu.memory_space<vmem>>, vector<1x1024xf32>
    %62 = arith.truncf %26 : vector<16x128xf32> to vector<16x128xbf16>
    %cst_31 = arith.constant dense<0.000000e+00> : vector<16x128xf32>
    %63 = tpu.matmul %62, %58, %cst_31 {dimension_numbers = #tpu.dot_dimension_numbers<[1], [0], [0], [1], [0, 0, 1, 1], [], []>} : vector<16x128xbf16>, vector<128x128xbf16>, vector<16x128xf32> -> vector<16x128xf32>
    %64 = vector.broadcast %59 : vector<1x128xf32> to vector<16x128xf32>
    %65 = arith.addf %63, %64 : vector<16x128xf32>
    %cst_32 = arith.constant 0.000000e+00 : f32
    %66 = vector.broadcast %cst_32 : f32 to vector<16x128xf32>
    %67 = arith.maximumf %65, %66 : vector<16x128xf32>
    %68 = arith.truncf %67 : vector<16x128xf32> to vector<16x128xbf16>
    %cst_33 = arith.constant dense<0.000000e+00> : vector<16x1024xf32>
    %69 = tpu.matmul %68, %60, %cst_33 {dimension_numbers = #tpu.dot_dimension_numbers<[1], [0], [0], [1], [0, 0, 1, 1], [], []>} : vector<16x128xbf16>, vector<128x1024xbf16>, vector<16x1024xf32> -> vector<16x1024xf32>
    %70 = vector.broadcast %61 : vector<1x1024xf32> to vector<16x1024xf32>
    %71 = arith.addf %69, %70 : vector<16x1024xf32>
    %72 = math.exp %71 : vector<16x1024xf32>
    %c0_34 = arith.constant 0 : index
    %c0_35 = arith.constant 0 : index
    %73 = vector.load %arg10[%c0_34, %c0_35] : memref<16x1024xf32, #tpu.memory_space<vmem>>, vector<16x1024xf32>
    tpu.vector_store %arg10[%c0_34, %c0_35], %72 {strides = array<i32>} : memref<16x1024xf32, #tpu.memory_space<vmem>>, vector<16x1024xf32>,
    %c0_36 = arith.constant 0 : index
    %c0_37 = arith.constant 0 : index
    %74 = vector.load %arg11[%c0_36, %c0_37] : memref<16x128xf32, #tpu.memory_space<vmem>>, vector<16x128xf32>
    tpu.vector_store %arg11[%c0_36, %c0_37], %57 {strides = array<i32>} : memref<16x128xf32, #tpu.memory_space<vmem>>, vector<16x128xf32>,
    return
  }
  func.func @transform_0(%arg0: i32) -> (i32, i32) {
    %c0_i32 = arith.constant 0 : i32
    %c0_i32_0 = arith.constant 0 : i32
    return %arg0, %c0_i32 : i32, i32
  }
  func.func @transform_1(%arg0: i32) -> (i32, i32) {
    %c0_i32 = arith.constant 0 : i32
    %c0_i32_0 = arith.constant 0 : i32
    %c0_i32_1 = arith.constant 0 : i32
    return %c0_i32, %c0_i32_0 : i32, i32
  }
  func.func @transform_2(%arg0: i32) -> (i32, i32) {
    %c0_i32 = arith.constant 0 : i32
    %c0_i32_0 = arith.constant 0 : i32
    %c0_i32_1 = arith.constant 0 : i32
    return %c0_i32, %c0_i32_0 : i32, i32
  }
  func.func @transform_3(%arg0: i32) -> (i32, i32) {
    %c0_i32 = arith.constant 0 : i32
    %c0_i32_0 = arith.constant 0 : i32
    %c0_i32_1 = arith.constant 0 : i32
    return %c0_i32, %c0_i32_0 : i32, i32
  }
  func.func @transform_4(%arg0: i32) -> (i32, i32) {
    %c0_i32 = arith.constant 0 : i32
    %c0_i32_0 = arith.constant 0 : i32
    %c0_i32_1 = arith.constant 0 : i32
    return %c0_i32, %c0_i32_0 : i32, i32
  }
  func.func @transform_5(%arg0: i32) -> (i32, i32) {
    %c0_i32 = arith.constant 0 : i32
    %c0_i32_0 = arith.constant 0 : i32
    %c0_i32_1 = arith.constant 0 : i32
    return %c0_i32, %c0_i32_0 : i32, i32
  }
  func.func @transform_6(%arg0: i32) -> (i32, i32) {
    %c0_i32 = arith.constant 0 : i32
    %c0_i32_0 = arith.constant 0 : i32
    %c0_i32_1 = arith.constant 0 : i32
    return %c0_i32, %c0_i32_0 : i32, i32
  }
  func.func @transform_7(%arg0: i32) -> (i32, i32) {
    %c0_i32 = arith.constant 0 : i32
    %c0_i32_0 = arith.constant 0 : i32
    %c0_i32_1 = arith.constant 0 : i32
    return %c0_i32, %c0_i32_0 : i32, i32
  }
  func.func @transform_8(%arg0: i32) -> (i32, i32) {
    %c0_i32 = arith.constant 0 : i32
    %c0_i32_0 = arith.constant 0 : i32
    %c0_i32_1 = arith.constant 0 : i32
    return %c0_i32, %c0_i32_0 : i32, i32
  }
  func.func @transform_9(%arg0: i32) -> (i32, i32) {
    %c0_i32 = arith.constant 0 : i32
    %c0_i32_0 = arith.constant 0 : i32
    return %arg0, %c0_i32 : i32, i32
  }
  func.func @transform_10(%arg0: i32) -> (i32, i32) {
    %c0_i32 = arith.constant 0 : i32
    %c0_i32_0 = arith.constant 0 : i32
    return %arg0, %c0_i32 : i32, i32
  }
}

</mosaic_0001>

<llo_original>
// kernel: fused_forward.1
$region0: #{fused_forward.1}
  #allocation0 [shape = 'u32[]', space=smem, size = 0x4, offset = 0x4, fixed_abs, tag = 'smem constant byte address 0x4 - core index']
  #allocation1 [shape = 'u32[144,128]{1,0:T(1,128)}', space=vmem, size = 0x12000, scoped, tag = 'internal scratch']
  %s0 = inlined_call_operand.vmem [shape: bf16[16,1024], index: 0, kind: input, shape index: {}]
  %s1 = inlined_call_operand.hbm [shape: bf16[1024,128], index: 1, kind: input, shape index: {}]
  %s2 = inlined_call_operand.vmem [shape: f32[1,128], index: 2, kind: input, shape index: {}]
  %s3 = inlined_call_operand.vmem [shape: bf16[128,128], index: 3, kind: input, shape index: {}]
  %s4 = inlined_call_operand.vmem [shape: f32[1,128], index: 4, kind: input, shape index: {}]
  %s5 = inlined_call_operand.hbm [shape: bf16[128,128], index: 5, kind: input, shape index: {}]
  %s6 = inlined_call_operand.vmem [shape: f32[1,128], index: 6, kind: input, shape index: {}]
  %s7 = inlined_call_operand.hbm [shape: bf16[128,1024], index: 7, kind: input, shape index: {}]
  %s8 = inlined_call_operand.vmem [shape: f32[1,1024], index: 8, kind: input, shape index: {}]
  %s9 = inlined_call_operand.vmem [shape: f32[16,1024], index: 9, kind: output, shape index: {0}]
  %s10 = inlined_call_operand.vmem [shape: f32[16,128], index: 10, kind: output, shape index: {1}]
  %11 = xla_tuple %s9, %s10
  %s12 = sld [smem:[#allocation0]]
  $region66: #{fused_forward.1} parent=0
    _
  %s14 = ssub.s32 1, %s12
  %s15 = scalar_select 0, %s14, %s12
  $region1: #{fused_forward.1} parent=0
    #allocation2 [shape = 'u8[262144]{0}', space=vmem, size = 0x40000, scoped, tag = 'input window, operand 1, single buffered']
    #allocation3 [shape = 's32[1]{0}', space=sflag, size = 0x4, scoped, tag = 'scoped memory for fused_forward.1']
    #allocation4 [shape = 'u8[32768]{0}', space=vmem, size = 0x8000, scoped, tag = 'input window, operand 5, single buffered']
    #allocation5 [shape = 's32[1]{0}', space=sflag, size = 0x4, scoped, tag = 'scoped memory for fused_forward.1']
    #allocation6 [shape = 'u8[262144]{0}', space=vmem, size = 0x40000, scoped, tag = 'input window, operand 7, single buffered']
    %16 = vsyncpa [#allocation3], 0
    %17 = vsyncpa [#allocation5], 0
    // Predicated region
    $region2: #{fused_forward.1} parent=1 // pred_check
      _
    $region3: #{fused_forward.1} parent=1 // pred_check_branch
      %19 = sbr.rel (0) target = $region5
    $region4: #{fused_forward.1} parent=1 // pred_region
      _
    $region5: #{fused_forward.1} parent=1 // pred_fallthru
      _
    // Predicated region
    $region6: #{fused_forward.1} parent=1 // pred_check
      _
    $region7: #{fused_forward.1} parent=1 // pred_check_branch
      %21 = sbr.rel (0) target = $region9
    $region8: #{fused_forward.1} parent=1 // pred_region
      %s23 = ssub.s32 8192, 8192
      %24 = vsyncadd [#allocation3], %s23
      %s25 = sshll.u32 [#allocation2], 4
      %s26 = int_to_ptr.vmem [resolvable:$true] %s25
      %31 = dma.hbm_to_vmem [thread:$0]  %s1, 8192, %s26, [#allocation3], 64, 64, 4
    $region9: #{fused_forward.1} parent=1 // pred_fallthru
      _
    // Predicated region
    $region10: #{fused_forward.1} parent=1 // pred_check
      _
    $region11: #{fused_forward.1} parent=1 // pred_check_branch
      %33 = sbr.rel (0) target = $region13
    $region12: #{fused_forward.1} parent=1 // pred_region
      _
    $region13: #{fused_forward.1} parent=1 // pred_fallthru
      _
    // Predicated region
    $region14: #{fused_forward.1} parent=1 // pred_check
      _
    $region15: #{fused_forward.1} parent=1 // pred_check_branch
      %35 = sbr.rel (0) target = $region17
    $region16: #{fused_forward.1} parent=1 // pred_region
      _
    $region17: #{fused_forward.1} parent=1 // pred_fallthru
      _
    // Predicated region
    $region18: #{fused_forward.1} parent=1 // pred_check
      _
    $region19: #{fused_forward.1} parent=1 // pred_check_branch
      %37 = sbr.rel (0) target = $region21
    $region20: #{fused_forward.1} parent=1 // pred_region
      _
    $region21: #{fused_forward.1} parent=1 // pred_fallthru
      _
    // Predicated region
    $region22: #{fused_forward.1} parent=1 // pred_check
      _
    $region23: #{fused_forward.1} parent=1 // pred_check_branch
      %39 = sbr.rel (0) target = $region25
    $region24: #{fused_forward.1} parent=1 // pred_region
      %s41 = ssub.s32 1024, 1024
      %42 = vsyncadd [#allocation5], %s41
      %s43 = sshll.u32 [#allocation4], 4
      %s44 = int_to_ptr.vmem [resolvable:$true] %s43
      %49 = dma.hbm_to_vmem [thread:$0]  %s5, 1024, %s44, [#allocation5], 64, 64, 4
    $region25: #{fused_forward.1} parent=1 // pred_fallthru
      _
    // Predicated region
    $region26: #{fused_forward.1} parent=1 // pred_check
      _
    $region27: #{fused_forward.1} parent=1 // pred_check_branch
      %51 = sbr.rel (0) target = $region29
    $region28: #{fused_forward.1} parent=1 // pred_region
      _
    $region29: #{fused_forward.1} parent=1 // pred_fallthru
      _
    // Predicated region
    $region30: #{fused_forward.1} parent=1 // pred_check
      _
    $region31: #{fused_forward.1} parent=1 // pred_check_branch
      %53 = sbr.rel (0) target = $region33
    $region32: #{fused_forward.1} parent=1 // pred_region
      %s55 = ssub.s32 8192, 8192
      %56 = vsyncadd [#allocation5], %s55
      %s57 = sshll.u32 [#allocation6], 4
      %s58 = int_to_ptr.vmem [resolvable:$true] %s57
      %63 = dma.hbm_to_vmem [thread:$0]  %s7, 8192, %s58, [#allocation5], 512, 512, 32
    $region33: #{fused_forward.1} parent=1 // pred_fallthru
      _
    // Predicated region
    $region34: #{fused_forward.1} parent=1 // pred_check
      _
    $region35: #{fused_forward.1} parent=1 // pred_check_branch
      %65 = sbr.rel (0) target = $region37
    $region36: #{fused_forward.1} parent=1 // pred_region
      _
    $region37: #{fused_forward.1} parent=1 // pred_fallthru
      _
    // Predicated region
    $region38: #{fused_forward.1} parent=1 // pred_check
      _
    $region39: #{fused_forward.1} parent=1 // pred_check_branch
      %67 = sbr.rel (0) target = $region41
    $region40: #{fused_forward.1} parent=1 // pred_region
      %68 = dma.done [#allocation3], 8192
    $region41: #{fused_forward.1} parent=1 // pred_fallthru
      _
    // Predicated region
    $region42: #{fused_forward.1} parent=1 // pred_check
      _
    $region43: #{fused_forward.1} parent=1 // pred_check_branch
      %70 = sbr.rel (0) target = $region45
    $region44: #{fused_forward.1} parent=1 // pred_region
      %71 = dma.done [#allocation5], 1024
    $region45: #{fused_forward.1} parent=1 // pred_fallthru
      _
    // Predicated region
    $region46: #{fused_forward.1} parent=1 // pred_check
      _
    $region47: #{fused_forward.1} parent=1 // pred_check_branch
      %73 = sbr.rel (0) target = $region49
    $region48: #{fused_forward.1} parent=1 // pred_region
      %74 = dma.done [#allocation5], 8192
    $region49: #{fused_forward.1} parent=1 // pred_fallthru
      _
    %v76 = vld [vmem:[%s0] sm:$0xff]
    %v77 = vld [vmem:[%s0 + $0x8] sm:$0xff]
    %v78 = vld [vmem:[%s0 + $0x10] sm:$0xff]
    %v79 = vld [vmem:[%s0 + $0x18] sm:$0xff]
    %v80 = vld [vmem:[%s0 + $0x20] sm:$0xff]
    %v81 = vld [vmem:[%s0 + $0x28] sm:$0xff]
    %v82 = vld [vmem:[%s0 + $0x30] sm:$0xff]
    %v83 = vld [vmem:[%s0 + $0x38] sm:$0xff]
    %v84 = vld [vmem:[#allocation2] sm:$0xf]
    %v85 = vld [vmem:[#allocation2 + $0x4] sm:$0xf]
    %v86 = vld [vmem:[#allocation2 + $0x8] sm:$0xf]
    %v87 = vld [vmem:[#allocation2 + $0xc] sm:$0xf]
    %v88 = vld [vmem:[#allocation2 + $0x10] sm:$0xf]
    %v89 = vld [vmem:[#allocation2 + $0x14] sm:$0xf]
    %v90 = vld [vmem:[#allocation2 + $0x18] sm:$0xf]
    %v91 = vld [vmem:[#allocation2 + $0x1c] sm:$0xf]
    %v92 = vld [vmem:[#allocation2 + $0x20] sm:$0xf]
    %v93 = vld [vmem:[#allocation2 + $0x24] sm:$0xf]
    %v94 = vld [vmem:[#allocation2 + $0x28] sm:$0xf]
    %v95 = vld [vmem:[#allocation2 + $0x2c] sm:$0xf]
    %v96 = vld [vmem:[#allocation2 + $0x30] sm:$0xf]
    %v97 = vld [vmem:[#allocation2 + $0x34] sm:$0xf]
    %v98 = vld [vmem:[#allocation2 + $0x38] sm:$0xf]
    %v99 = vld [vmem:[#allocation2 + $0x3c] sm:$0xf]
    %v100 = vld [vmem:[#allocation2 + $0x40] sm:$0xf]
    %v101 = vld [vmem:[#allocation2 + $0x44] sm:$0xf]
    %v102 = vld [vmem:[#allocation2 + $0x48] sm:$0xf]
    %v103 = vld [vmem:[#allocation2 + $0x4c] sm:$0xf]
    %v104 = vld [vmem:[#allocation2 + $0x50] sm:$0xf]
    %v105 = vld [vmem:[#allocation2 + $0x54] sm:$0xf]
    %v106 = vld [vmem:[#allocation2 + $0x58] sm:$0xf]
    %v107 = vld [vmem:[#allocation2 + $0x5c] sm:$0xf]
    %v108 = vld [vmem:[#allocation2 + $0x60] sm:$0xf]
    %v109 = vld [vmem:[#allocation2 + $0x64] sm:$0xf]
    %v110 = vld [vmem:[#allocation2 + $0x68] sm:$0xf]
    %v111 = vld [vmem:[#allocation2 + $0x6c] sm:$0xf]
    %v112 = vld [vmem:[#allocation2 + $0x70] sm:$0xf]
    %v113 = vld [vmem:[#allocation2 + $0x74] sm:$0xf]
    %v114 = vld [vmem:[#allocation2 + $0x78] sm:$0xf]
    %v115 = vld [vmem:[#allocation2 + $0x7c] sm:$0xf]
    %v116 = vld [vmem:[#allocation2 + $0x80] sm:$0xf]
    %v117 = vld [vmem:[#allocation2 + $0x84] sm:$0xf]
    %v118 = vld [vmem:[#allocation2 + $0x88] sm:$0xf]
    %v119 = vld [vmem:[#allocation2 + $0x8c] sm:$0xf]
    %v120 = vld [vmem:[#allocation2 + $0x90] sm:$0xf]
    %v121 = vld [vmem:[#allocation2 + $0x94] sm:$0xf]
    %v122 = vld [vmem:[#allocation2 + $0x98] sm:$0xf]
    %v123 = vld [vmem:[#allocation2 + $0x9c] sm:$0xf]
    %v124 = vld [vmem:[#allocation2 + $0xa0] sm:$0xf]
    %v125 = vld [vmem:[#allocation2 + $0xa4] sm:$0xf]
    %v126 = vld [vmem:[#allocation2 + $0xa8] sm:$0xf]
    %v127 = vld [vmem:[#allocation2 + $0xac] sm:$0xf]
    %v128 = vld [vmem:[#allocation2 + $0xb0] sm:$0xf]
    %v129 = vld [vmem:[#allocation2 + $0xb4] sm:$0xf]
    %v130 = vld [vmem:[#allocation2 + $0xb8] sm:$0xf]
    %v131 = vld [vmem:[#allocation2 + $0xbc] sm:$0xf]
    %v132 = vld [vmem:[#allocation2 + $0xc0] sm:$0xf]
    %v133 = vld [vmem:[#allocation2 + $0xc4] sm:$0xf]
    %v134 = vld [vmem:[#allocation2 + $0xc8] sm:$0xf]
    %v135 = vld [vmem:[#allocation2 + $0xcc] sm:$0xf]
    %v136 = vld [vmem:[#allocation2 + $0xd0] sm:$0xf]
    %v137 = vld [vmem:[#allocation2 + $0xd4] sm:$0xf]
    %v138 = vld [vmem:[#allocation2 + $0xd8] sm:$0xf]
    %v139 = vld [vmem:[#allocation2 + $0xdc] sm:$0xf]
    %v140 = vld [vmem:[#allocation2 + $0xe0] sm:$0xf]
    %v141 = vld [vmem:[#allocation2 + $0xe4] sm:$0xf]
    %v142 = vld [vmem:[#allocation2 + $0xe8] sm:$0xf]
    %v143 = vld [vmem:[#allocation2 + $0xec] sm:$0xf]
    %v144 = vld [vmem:[#allocation2 + $0xf0] sm:$0xf]
    %v145 = vld [vmem:[#allocation2 + $0xf4] sm:$0xf]
    %v146 = vld [vmem:[#allocation2 + $0xf8] sm:$0xf]
    %v147 = vld [vmem:[#allocation2 + $0xfc] sm:$0xf]
    %v148 = vld [vmem:[#allocation2 + $0x100] sm:$0xf]
    %v149 = vld [vmem:[#allocation2 + $0x104] sm:$0xf]
    %v150 = vld [vmem:[#allocation2 + $0x108] sm:$0xf]
    %v151 = vld [vmem:[#allocation2 + $0x10c] sm:$0xf]
    %v152 = vld [vmem:[#allocation2 + $0x110] sm:$0xf]
    %v153 = vld [vmem:[#allocation2 + $0x114] sm:$0xf]
    %v154 = vld [vmem:[#allocation2 + $0x118] sm:$0xf]
    %v155 = vld [vmem:[#allocation2 + $0x11c] sm:$0xf]
    %v156 = vld [vmem:[#allocation2 + $0x120] sm:$0xf]
    %v157 = vld [vmem:[#allocation2 + $0x124] sm:$0xf]
    %v158 = vld [vmem:[#allocation2 + $0x128] sm:$0xf]
    %v159 = vld [vmem:[#allocation2 + $0x12c] sm:$0xf]
    %v160 = vld [vmem:[#allocation2 + $0x130] sm:$0xf]
    %v161 = vld [vmem:[#allocation2 + $0x134] sm:$0xf]
    %v162 = vld [vmem:[#allocation2 + $0x138] sm:$0xf]
    %v163 = vld [vmem:[#allocation2 + $0x13c] sm:$0xf]
    %v164 = vld [vmem:[#allocation2 + $0x140] sm:$0xf]
    %v165 = vld [vmem:[#allocation2 + $0x144] sm:$0xf]
    %v166 = vld [vmem:[#allocation2 + $0x148] sm:$0xf]
    %v167 = vld [vmem:[#allocation2 + $0x14c] sm:$0xf]
    %v168 = vld [vmem:[#allocation2 + $0x150] sm:$0xf]
    %v169 = vld [vmem:[#allocation2 + $0x154] sm:$0xf]
    %v170 = vld [vmem:[#allocation2 + $0x158] sm:$0xf]
    %v171 = vld [vmem:[#allocation2 + $0x15c] sm:$0xf]
    %v172 = vld [vmem:[#allocation2 + $0x160] sm:$0xf]
    %v173 = vld [vmem:[#allocation2 + $0x164] sm:$0xf]
    %v174 = vld [vmem:[#allocation2 + $0x168] sm:$0xf]
    %v175 = vld [vmem:[#allocation2 + $0x16c] sm:$0xf]
    %v176 = vld [vmem:[#allocation2 + $0x170] sm:$0xf]
    %v177 = vld [vmem:[#allocation2 + $0x174] sm:$0xf]
    %v178 = vld [vmem:[#allocation2 + $0x178] sm:$0xf]
    %v179 = vld [vmem:[#allocation2 + $0x17c] sm:$0xf]
    %v180 = vld [vmem:[#allocation2 + $0x180] sm:$0xf]
    %v181 = vld [vmem:[#allocation2 + $0x184] sm:$0xf]
    %v182 = vld [vmem:[#allocation2 + $0x188] sm:$0xf]
    %v183 = vld [vmem:[#allocation2 + $0x18c] sm:$0xf]
    %v184 = vld [vmem:[#allocation2 + $0x190] sm:$0xf]
    %v185 = vld [vmem:[#allocation2 + $0x194] sm:$0xf]
    %v186 = vld [vmem:[#allocation2 + $0x198] sm:$0xf]
    %v187 = vld [vmem:[#allocation2 + $0x19c] sm:$0xf]
    %v188 = vld [vmem:[#allocation2 + $0x1a0] sm:$0xf]
    %v189 = vld [vmem:[#allocation2 + $0x1a4] sm:$0xf]
    %v190 = vld [vmem:[#allocation2 + $0x1a8] sm:$0xf]
    %v191 = vld [vmem:[#allocation2 + $0x1ac] sm:$0xf]
    %v192 = vld [vmem:[#allocation2 + $0x1b0] sm:$0xf]
    %v193 = vld [vmem:[#allocation2 + $0x1b4] sm:$0xf]
    %v194 = vld [vmem:[#allocation2 + $0x1b8] sm:$0xf]
    %v195 = vld [vmem:[#allocation2 + $0x1bc] sm:$0xf]
    %v196 = vld [vmem:[#allocation2 + $0x1c0] sm:$0xf]
    %v197 = vld [vmem:[#allocation2 + $0x1c4] sm:$0xf]
    %v198 = vld [vmem:[#allocation2 + $0x1c8] sm:$0xf]
    %v199 = vld [vmem:[#allocation2 + $0x1cc] sm:$0xf]
    %v200 = vld [vmem:[#allocation2 + $0x1d0] sm:$0xf]
    %v201 = vld [vmem:[#allocation2 + $0x1d4] sm:$0xf]
    %v202 = vld [vmem:[#allocation2 + $0x1d8] sm:$0xf]
    %v203 = vld [vmem:[#allocation2 + $0x1dc] sm:$0xf]
    %v204 = vld [vmem:[#allocation2 + $0x1e0] sm:$0xf]
    %v205 = vld [vmem:[#allocation2 + $0x1e4] sm:$0xf]
    %v206 = vld [vmem:[#allocation2 + $0x1e8] sm:$0xf]
    %v207 = vld [vmem:[#allocation2 + $0x1ec] sm:$0xf]
    %v208 = vld [vmem:[#allocation2 + $0x1f0] sm:$0xf]
    %v209 = vld [vmem:[#allocation2 + $0x1f4] sm:$0xf]
    %v210 = vld [vmem:[#allocation2 + $0x1f8] sm:$0xf]
    %v211 = vld [vmem:[#allocation2 + $0x1fc] sm:$0xf]
    %v212 = vld [vmem:[%s2] sm:$0x1]
    %v213 = vld [vmem:[%s3] sm:$0xf]
    %v214 = vld [vmem:[%s3 + $0x4] sm:$0xf]
    %v215 = vld [vmem:[%s3 + $0x8] sm:$0xf]
    %v216 = vld [vmem:[%s3 + $0xc] sm:$0xf]
    %v217 = vld [vmem:[%s3 + $0x10] sm:$0xf]
    %v218 = vld [vmem:[%s3 + $0x14] sm:$0xf]
    %v219 = vld [vmem:[%s3 + $0x18] sm:$0xf]
    %v220 = vld [vmem:[%s3 + $0x1c] sm:$0xf]
    %v221 = vld [vmem:[%s3 + $0x20] sm:$0xf]
    %v222 = vld [vmem:[%s3 + $0x24] sm:$0xf]
    %v223 = vld [vmem:[%s3 + $0x28] sm:$0xf]
    %v224 = vld [vmem:[%s3 + $0x2c] sm:$0xf]
    %v225 = vld [vmem:[%s3 + $0x30] sm:$0xf]
    %v226 = vld [vmem:[%s3 + $0x34] sm:$0xf]
    %v227 = vld [vmem:[%s3 + $0x38] sm:$0xf]
    %v228 = vld [vmem:[%s3 + $0x3c] sm:$0xf]
    %v229 = vld [vmem:[%s4] sm:$0x1]
    %v231 = vlaneseq
    %v232 = vshrl.u32 %v231, 7
    %v233 = vsub.s32 0, %v232
    %v234 = vrot.slane %v212, %v233
    %v244 = vunpack.c.l.b16 %v76
    %v245 = vunpack.c.h.b16 %v76
    %v246 = vunpack.c.l.b16 %v77
    %v247 = vunpack.c.h.b16 %v77
    %v248 = vunpack.c.l.b16 %v78
    %v249 = vunpack.c.h.b16 %v78
    %v250 = vunpack.c.l.b16 %v79
    %v251 = vunpack.c.h.b16 %v79
    %v252 = vunpack.c.l.b16 %v80
    %v253 = vunpack.c.h.b16 %v80
    %v254 = vunpack.c.l.b16 %v81
    %v255 = vunpack.c.h.b16 %v81
    %v256 = vunpack.c.l.b16 %v82
    %v257 = vunpack.c.h.b16 %v82
    %v258 = vunpack.c.l.b16 %v83
    %v259 = vunpack.c.h.b16 %v83
    %v260 = vpack.c.b16 %v252, %v244
    %v261 = vpack.c.b16 %v253, %v245
    %v262 = vpack.c.b16 %v254, %v246
    %v263 = vpack.c.b16 %v255, %v247
    %v264 = vpack.c.b16 %v256, %v248
    %v265 = vpack.c.b16 %v257, %v249
    %v266 = vpack.c.b16 %v258, %v250
    %v267 = vpack.c.b16 %v259, %v251
    %v404 = vunpack.c.l.b16 %v84
    %v405 = vunpack.c.l.b16 %v85
    %v406 = vunpack.c.l.b16 %v86
    %v407 = vunpack.c.l.b16 %v87
    %v408 = vunpack.c.l.b16 %v88
    %v409 = vunpack.c.l.b16 %v89
    %v410 = vunpack.c.l.b16 %v90
    %v411 = vunpack.c.l.b16 %v91
    %v412 = vunpack.c.l.b16 %v92
    %v413 = vunpack.c.l.b16 %v93
    %v414 = vunpack.c.l.b16 %v94
    %v415 = vunpack.c.l.b16 %v95
    %v416 = vunpack.c.l.b16 %v96
    %v417 = vunpack.c.l.b16 %v97
    %v418 = vunpack.c.l.b16 %v98
    %v419 = vunpack.c.l.b16 %v99
    %v420 = vunpack.c.l.b16 %v100
    %v421 = vunpack.c.l.b16 %v101
    %v422 = vunpack.c.l.b16 %v102
    %v423 = vunpack.c.l.b16 %v103
    %v424 = vunpack.c.l.b16 %v104
    %v425 = vunpack.c.l.b16 %v105
    %v426 = vunpack.c.l.b16 %v106
    %v427 = vunpack.c.l.b16 %v107
    %v428 = vunpack.c.l.b16 %v108
    %v429 = vunpack.c.l.b16 %v109
    %v430 = vunpack.c.l.b16 %v110
    %v431 = vunpack.c.l.b16 %v111
    %v432 = vunpack.c.l.b16 %v112
    %v433 = vunpack.c.l.b16 %v113
    %v434 = vunpack.c.l.b16 %v114
    %v435 = vunpack.c.l.b16 %v115
    %v436 = vunpack.c.l.b16 %v116
    %v437 = vunpack.c.l.b16 %v117
    %v438 = vunpack.c.l.b16 %v118
    %v439 = vunpack.c.l.b16 %v119
    %v440 = vunpack.c.l.b16 %v120
    %v441 = vunpack.c.l.b16 %v121
    %v442 = vunpack.c.l.b16 %v122
    %v443 = vunpack.c.l.b16 %v123
    %v444 = vunpack.c.l.b16 %v124
    %v445 = vunpack.c.l.b16 %v125
    %v446 = vunpack.c.l.b16 %v126
    %v447 = vunpack.c.l.b16 %v127
    %v448 = vunpack.c.l.b16 %v128
    %v449 = vunpack.c.l.b16 %v129
    %v450 = vunpack.c.l.b16 %v130
    %v451 = vunpack.c.l.b16 %v131
    %v452 = vunpack.c.l.b16 %v132
    %v453 = vunpack.c.l.b16 %v133
    %v454 = vunpack.c.l.b16 %v134
    %v455 = vunpack.c.l.b16 %v135
    %v456 = vunpack.c.l.b16 %v136
    %v457 = vunpack.c.l.b16 %v137
    %v458 = vunpack.c.l.b16 %v138
    %v459 = vunpack.c.l.b16 %v139
    %v460 = vunpack.c.l.b16 %v140
    %v461 = vunpack.c.l.b16 %v141
    %v462 = vunpack.c.l.b16 %v142
    %v463 = vunpack.c.l.b16 %v143
    %v464 = vunpack.c.l.b16 %v144
    %v465 = vunpack.c.l.b16 %v145
    %v466 = vunpack.c.l.b16 %v146
    %v467 = vunpack.c.l.b16 %v147
    %v468 = vunpack.c.l.b16 %v148
    %v469 = vunpack.c.l.b16 %v149
    %v470 = vunpack.c.l.b16 %v150
    %v471 = vunpack.c.l.b16 %v151
    %v472 = vunpack.c.l.b16 %v152
    %v473 = vunpack.c.l.b16 %v153
    %v474 = vunpack.c.l.b16 %v154
    %v475 = vunpack.c.l.b16 %v155
    %v476 = vunpack.c.l.b16 %v156
    %v477 = vunpack.c.l.b16 %v157
    %v478 = vunpack.c.l.b16 %v158
    %v479 = vunpack.c.l.b16 %v159
    %v480 = vunpack.c.l.b16 %v160
    %v481 = vunpack.c.l.b16 %v161
    %v482 = vunpack.c.l.b16 %v162
    %v483 = vunpack.c.l.b16 %v163
    %v484 = vunpack.c.l.b16 %v164
    %v485 = vunpack.c.l.b16 %v165
    %v486 = vunpack.c.l.b16 %v166
    %v487 = vunpack.c.l.b16 %v167
    %v488 = vunpack.c.l.b16 %v168
    %v489 = vunpack.c.l.b16 %v169
    %v490 = vunpack.c.l.b16 %v170
    %v491 = vunpack.c.l.b16 %v171
    %v492 = vunpack.c.l.b16 %v172
    %v493 = vunpack.c.l.b16 %v173
    %v494 = vunpack.c.l.b16 %v174
    %v495 = vunpack.c.l.b16 %v175
    %v496 = vunpack.c.l.b16 %v176
    %v497 = vunpack.c.l.b16 %v177
    %v498 = vunpack.c.l.b16 %v178
    %v499 = vunpack.c.l.b16 %v179
    %v500 = vunpack.c.l.b16 %v180
    %v501 = vunpack.c.l.b16 %v181
    %v502 = vunpack.c.l.b16 %v182
    %v503 = vunpack.c.l.b16 %v183
    %v504 = vunpack.c.l.b16 %v184
    %v505 = vunpack.c.l.b16 %v185
    %v506 = vunpack.c.l.b16 %v186
    %v507 = vunpack.c.l.b16 %v187
    %v508 = vunpack.c.l.b16 %v188
    %v509 = vunpack.c.l.b16 %v189
    %v510 = vunpack.c.l.b16 %v190
    %v511 = vunpack.c.l.b16 %v191
    %v512 = vunpack.c.l.b16 %v192
    %v513 = vunpack.c.l.b16 %v193
    %v514 = vunpack.c.l.b16 %v194
    %v515 = vunpack.c.l.b16 %v195
    %v516 = vunpack.c.l.b16 %v196
    %v517 = vunpack.c.l.b16 %v197
    %v518 = vunpack.c.l.b16 %v198
    %v519 = vunpack.c.l.b16 %v199
    %v520 = vunpack.c.l.b16 %v200
    %v521 = vunpack.c.l.b16 %v201
    %v522 = vunpack.c.l.b16 %v202
    %v523 = vunpack.c.l.b16 %v203
    %v524 = vunpack.c.l.b16 %v204
    %v525 = vunpack.c.l.b16 %v205
    %v526 = vunpack.c.l.b16 %v206
    %v527 = vunpack.c.l.b16 %v207
    %v528 = vunpack.c.l.b16 %v208
    %v529 = vunpack.c.l.b16 %v209
    %v530 = vunpack.c.l.b16 %v210
    %v531 = vunpack.c.l.b16 %v211
    %v532 = vpack.c.b16 %v405, %v404
    %v533 = vpack.c.b16 %v407, %v406
    %v534 = vpack.c.b16 %v409, %v408
    %v535 = vpack.c.b16 %v411, %v410
    %v536 = vpack.c.b16 %v413, %v412
    %v537 = vpack.c.b16 %v415, %v414
    %v538 = vpack.c.b16 %v417, %v416
    %v539 = vpack.c.b16 %v419, %v418
    %v540 = vpack.c.b16 %v421, %v420
    %v541 = vpack.c.b16 %v423, %v422
    %v542 = vpack.c.b16 %v425, %v424
    %v543 = vpack.c.b16 %v427, %v426
    %v544 = vpack.c.b16 %v429, %v428
    %v545 = vpack.c.b16 %v431, %v430
    %v546 = vpack.c.b16 %v433, %v432
    %v547 = vpack.c.b16 %v435, %v434
    %v548 = vpack.c.b16 %v437, %v436
    %v549 = vpack.c.b16 %v439, %v438
    %v550 = vpack.c.b16 %v441, %v440
    %v551 = vpack.c.b16 %v443, %v442
    %v552 = vpack.c.b16 %v445, %v444
    %v553 = vpack.c.b16 %v447, %v446
    %v554 = vpack.c.b16 %v449, %v448
    %v555 = vpack.c.b16 %v451, %v450
    %v556 = vpack.c.b16 %v453, %v452
    %v557 = vpack.c.b16 %v455, %v454
    %v558 = vpack.c.b16 %v457, %v456
    %v559 = vpack.c.b16 %v459, %v458
    %v560 = vpack.c.b16 %v461, %v460
    %v561 = vpack.c.b16 %v463, %v462
    %v562 = vpack.c.b16 %v465, %v464
    %v563 = vpack.c.b16 %v467, %v466
    %v564 = vpack.c.b16 %v469, %v468
    %v565 = vpack.c.b16 %v471, %v470
    %v566 = vpack.c.b16 %v473, %v472
    %v567 = vpack.c.b16 %v475, %v474
    %v568 = vpack.c.b16 %v477, %v476
    %v569 = vpack.c.b16 %v479, %v478
    %v570 = vpack.c.b16 %v481, %v480
    %v571 = vpack.c.b16 %v483, %v482
    %v572 = vpack.c.b16 %v485, %v484
    %v573 = vpack.c.b16 %v487, %v486
    %v574 = vpack.c.b16 %v489, %v488
    %v575 = vpack.c.b16 %v491, %v490
    %v576 = vpack.c.b16 %v493, %v492
    %v577 = vpack.c.b16 %v495, %v494
    %v578 = vpack.c.b16 %v497, %v496
    %v579 = vpack.c.b16 %v499, %v498
    %v580 = vpack.c.b16 %v501, %v500
    %v581 = vpack.c.b16 %v503, %v502
    %v582 = vpack.c.b16 %v505, %v504
    %v583 = vpack.c.b16 %v507, %v506
    %v584 = vpack.c.b16 %v509, %v508
    %v585 = vpack.c.b16 %v511, %v510
    %v586 = vpack.c.b16 %v513, %v512
    %v587 = vpack.c.b16 %v515, %v514
    %v588 = vpack.c.b16 %v517, %v516
    %v589 = vpack.c.b16 %v519, %v518
    %v590 = vpack.c.b16 %v521, %v520
    %v591 = vpack.c.b16 %v523, %v522
    %v592 = vpack.c.b16 %v525, %v524
    %v593 = vpack.c.b16 %v527, %v526
    %v594 = vpack.c.b16 %v529, %v528
    %v595 = vpack.c.b16 %v531, %v530
    %660 = vmatprep.subr.bf16.mxu0 0
    %661 = vmatpush1.bf16.msra.mxu0 %v539
    %662 = vmatprep.subr.bf16.mxu0 0
    %663 = vmatpush1.bf16.msra.mxu0 %v538
    %664 = vmatprep.subr.bf16.mxu0 0
    %665 = vmatpush1.bf16.msra.mxu0 %v537
    %666 = vmatprep.subr.bf16.mxu0 0
    %667 = vmatpush1.bf16.msra.mxu0 %v536
    %668 = vmatprep.subr.bf16.mxu0 0
    %669 = vmatpush1.bf16.msra.mxu0 %v535
    %670 = vmatprep.subr.bf16.mxu0 0
    %671 = vmatpush1.bf16.msra.mxu0 %v534
    %672 = vmatprep.subr.bf16.mxu0 0
    %673 = vmatpush1.bf16.msra.mxu0 %v533
    %674 = vmatprep.subr.bf16.mxu0 0
    %675 = vmatpush1.bf16.msra.mxu0 %v532
    %676 = vmatprep.subr.bf16.mxu0 0
    %677 = vmatpush2.bf16.msra.mxu0 %v547
    %678 = vmatprep.subr.bf16.mxu0 0
    %679 = vmatpush2.bf16.msra.mxu0 %v546
    %680 = vmatprep.subr.bf16.mxu0 0
    %681 = vmatpush2.bf16.msra.mxu0 %v545
    %682 = vmatprep.subr.bf16.mxu0 0
    %683 = vmatpush2.bf16.msra.mxu0 %v544
    %684 = vmatprep.subr.bf16.mxu0 0
    %685 = vmatpush2.bf16.msra.mxu0 %v543
    %686 = vmatprep.subr.bf16.mxu0 0
    %687 = vmatpush2.bf16.msra.mxu0 %v542
    %688 = vmatprep.subr.bf16.mxu0 0
    %689 = vmatpush2.bf16.msra.mxu0 %v541
    %690 = vmatprep.subr.bf16.mxu0 0
    %691 = vmatpush2.bf16.msra.mxu0 %v540
    %692 = vmatprep.mubr.bf16.mxu0 %v261
    %693 = vmatmul.mubr.bf16.gmra.mxu0 %v260
    %v694 = vpop.f32.mrf.mxu0
    %v695 = vadd.f32 %v234, %v694
    %v696 = vpop.f32.mrf.mxu0
    %v697 = vpop.f32.mrf.mxu0
    %v698 = vadd.f32 %v234, %v697
    %v699 = vpop.f32.mrf.mxu0
    %700 = vdwg.mxu0
    %701 = vmatprep.subr.bf16.mxu0 0
    %702 = vmatpush1.bf16.msra.mxu0 %v555
    %703 = vmatprep.subr.bf16.mxu0 0
    %704 = vmatpush1.bf16.msra.mxu0 %v554
    %705 = vmatprep.subr.bf16.mxu0 0
    %706 = vmatpush1.bf16.msra.mxu0 %v553
    %707 = vmatprep.subr.bf16.mxu0 0
    %708 = vmatpush1.bf16.msra.mxu0 %v552
    %709 = vmatprep.subr.bf16.mxu0 0
    %710 = vmatpush1.bf16.msra.mxu0 %v551
    %711 = vmatprep.subr.bf16.mxu0 0
    %712 = vmatpush1.bf16.msra.mxu0 %v550
    %713 = vmatprep.subr.bf16.mxu0 0
    %714 = vmatpush1.bf16.msra.mxu0 %v549
    %715 = vmatprep.subr.bf16.mxu0 0
    %716 = vmatpush1.bf16.msra.mxu0 %v548
    %717 = vmatprep.subr.bf16.mxu0 0
    %718 = vmatpush2.bf16.msra.mxu0 %v563
    %719 = vmatprep.subr.bf16.mxu0 0
    %720 = vmatpush2.bf16.msra.mxu0 %v562
    %721 = vmatprep.subr.bf16.mxu0 0
    %722 = vmatpush2.bf16.msra.mxu0 %v561
    %723 = vmatprep.subr.bf16.mxu0 0
    %724 = vmatpush2.bf16.msra.mxu0 %v560
    %725 = vmatprep.subr.bf16.mxu0 0
    %726 = vmatpush2.bf16.msra.mxu0 %v559
    %727 = vmatprep.subr.bf16.mxu0 0
    %728 = vmatpush2.bf16.msra.mxu0 %v558
    %729 = vmatprep.subr.bf16.mxu0 0
    %730 = vmatpush2.bf16.msra.mxu0 %v557
    %731 = vmatprep.subr.bf16.mxu0 0
    %732 = vmatpush2.bf16.msra.mxu0 %v556
    %733 = vmatprep.mubr.bf16.mxu0 %v263
    %734 = vmatmul.mubr.bf16.gmra.mxu0 %v262
    %v735 = vpop.f32.mrf.mxu0
    %v736 = vadd.f32 %v695, %v735
    %v737 = vpop.f32.mrf.mxu0
    %v738 = vpop.f32.mrf.mxu0
    %v739 = vadd.f32 %v698, %v738
    %v740 = vpop.f32.mrf.mxu0
    %741 = vdwg.mxu0
    %742 = vmatprep.subr.bf16.mxu0 0
    %743 = vmatpush1.bf16.msra.mxu0 %v571
    %744 = vmatprep.subr.bf16.mxu0 0
    %745 = vmatpush1.bf16.msra.mxu0 %v570
    %746 = vmatprep.subr.bf16.mxu0 0
    %747 = vmatpush1.bf16.msra.mxu0 %v569
    %748 = vmatprep.subr.bf16.mxu0 0
    %749 = vmatpush1.bf16.msra.mxu0 %v568
    %750 = vmatprep.subr.bf16.mxu0 0
    %751 = vmatpush1.bf16.msra.mxu0 %v567
    %752 = vmatprep.subr.bf16.mxu0 0
    %753 = vmatpush1.bf16.msra.mxu0 %v566
    %754 = vmatprep.subr.bf16.mxu0 0
    %755 = vmatpush1.bf16.msra.mxu0 %v565
    %756 = vmatprep.subr.bf16.mxu0 0
    %757 = vmatpush1.bf16.msra.mxu0 %v564
    %758 = vmatprep.subr.bf16.mxu0 0
    %759 = vmatpush2.bf16.msra.mxu0 %v579
    %760 = vmatprep.subr.bf16.mxu0 0
    %761 = vmatpush2.bf16.msra.mxu0 %v578
    %762 = vmatprep.subr.bf16.mxu0 0
    %763 = vmatpush2.bf16.msra.mxu0 %v577
    %764 = vmatprep.subr.bf16.mxu0 0
    %765 = vmatpush2.bf16.msra.mxu0 %v576
    %766 = vmatprep.subr.bf16.mxu0 0
    %767 = vmatpush2.bf16.msra.mxu0 %v575
    %768 = vmatprep.subr.bf16.mxu0 0
    %769 = vmatpush2.bf16.msra.mxu0 %v574
    %770 = vmatprep.subr.bf16.mxu0 0
    %771 = vmatpush2.bf16.msra.mxu0 %v573
    %772 = vmatprep.subr.bf16.mxu0 0
    %773 = vmatpush2.bf16.msra.mxu0 %v572
    %774 = vmatprep.mubr.bf16.mxu0 %v265
    %775 = vmatmul.mubr.bf16.gmra.mxu0 %v264
    %v776 = vpop.f32.mrf.mxu0
    %v777 = vadd.f32 %v736, %v776
    %v778 = vpop.f32.mrf.mxu0
    %v779 = vpop.f32.mrf.mxu0
    %v780 = vadd.f32 %v739, %v779
    %v781 = vpop.f32.mrf.mxu0
    %782 = vdwg.mxu0
    %783 = vmatprep.subr.bf16.mxu0 0
    %784 = vmatpush1.bf16.msra.mxu0 %v587
    %785 = vmatprep.subr.bf16.mxu0 0
    %786 = vmatpush1.bf16.msra.mxu0 %v586
    %787 = vmatprep.subr.bf16.mxu0 0
    %788 = vmatpush1.bf16.msra.mxu0 %v585
    %789 = vmatprep.subr.bf16.mxu0 0
    %790 = vmatpush1.bf16.msra.mxu0 %v584
    %791 = vmatprep.subr.bf16.mxu0 0
    %792 = vmatpush1.bf16.msra.mxu0 %v583
    %793 = vmatprep.subr.bf16.mxu0 0
    %794 = vmatpush1.bf16.msra.mxu0 %v582
    %795 = vmatprep.subr.bf16.mxu0 0
    %796 = vmatpush1.bf16.msra.mxu0 %v581
    %797 = vmatprep.subr.bf16.mxu0 0
    %798 = vmatpush1.bf16.msra.mxu0 %v580
    %799 = vmatprep.subr.bf16.mxu0 0
    %800 = vmatpush2.bf16.msra.mxu0 %v595
    %801 = vmatprep.subr.bf16.mxu0 0
    %802 = vmatpush2.bf16.msra.mxu0 %v594
    %803 = vmatprep.subr.bf16.mxu0 0
    %804 = vmatpush2.bf16.msra.mxu0 %v593
    %805 = vmatprep.subr.bf16.mxu0 0
    %806 = vmatpush2.bf16.msra.mxu0 %v592
    %807 = vmatprep.subr.bf16.mxu0 0
    %808 = vmatpush2.bf16.msra.mxu0 %v591
    %809 = vmatprep.subr.bf16.mxu0 0
    %810 = vmatpush2.bf16.msra.mxu0 %v590
    %811 = vmatprep.subr.bf16.mxu0 0
    %812 = vmatpush2.bf16.msra.mxu0 %v589
    %813 = vmatprep.subr.bf16.mxu0 0
    %814 = vmatpush2.bf16.msra.mxu0 %v588
    %815 = vmatprep.mubr.bf16.mxu0 %v267
    %816 = vmatmul.mubr.bf16.gmra.mxu0 %v266
    %v817 = vpop.f32.mrf.mxu0
    %v818 = vadd.f32 %v777, %v817
    %v819 = vpop.f32.mrf.mxu0
    %v820 = vpop.f32.mrf.mxu0
    %v821 = vadd.f32 %v780, %v820
    %v822 = vpop.f32.mrf.mxu0
    %823 = vdwg.mxu0
    %v824 = vmax.f32 %v818, 0.0
    %v825 = vmax.f32 %v821, 0.0
    %v826 = vpack.c.bf16 %v825, %v824
    %v828 = vlaneseq
    %v829 = vshrl.u32 %v828, 7
    %v830 = vsub.s32 0, %v829
    %v831 = vrot.slane %v229, %v830
    %v849 = vunpack.c.l.b16 %v213
    %v850 = vunpack.c.l.b16 %v214
    %v851 = vunpack.c.l.b16 %v215
    %v852 = vunpack.c.l.b16 %v216
    %v853 = vunpack.c.l.b16 %v217
    %v854 = vunpack.c.l.b16 %v218
    %v855 = vunpack.c.l.b16 %v219
    %v856 = vunpack.c.l.b16 %v220
    %v857 = vunpack.c.l.b16 %v221
    %v858 = vunpack.c.l.b16 %v222
    %v859 = vunpack.c.l.b16 %v223
    %v860 = vunpack.c.l.b16 %v224
    %v861 = vunpack.c.l.b16 %v225
    %v862 = vunpack.c.l.b16 %v226
    %v863 = vunpack.c.l.b16 %v227
    %v864 = vunpack.c.l.b16 %v228
    %v865 = vpack.c.b16 %v850, %v849
    %v866 = vpack.c.b16 %v852, %v851
    %v867 = vpack.c.b16 %v854, %v853
    %v868 = vpack.c.b16 %v856, %v855
    %v869 = vpack.c.b16 %v858, %v857
    %v870 = vpack.c.b16 %v860, %v859
    %v871 = vpack.c.b16 %v862, %v861
    %v872 = vpack.c.b16 %v864, %v863
    %881 = vmatprep.subr.bf16.mxu0 0
    %882 = vmatpush1.bf16.msra.mxu0 %v872
    %883 = vmatprep.subr.bf16.mxu0 0
    %884 = vmatpush1.bf16.msra.mxu0 %v871
    %885 = vmatprep.subr.bf16.mxu0 0
    %886 = vmatpush1.bf16.msra.mxu0 %v870
    %887 = vmatprep.subr.bf16.mxu0 0
    %888 = vmatpush1.bf16.msra.mxu0 %v869
    %889 = vmatprep.subr.bf16.mxu0 0
    %890 = vmatpush1.bf16.msra.mxu0 %v868
    %891 = vmatprep.subr.bf16.mxu0 0
    %892 = vmatpush1.bf16.msra.mxu0 %v867
    %893 = vmatprep.subr.bf16.mxu0 0
    %894 = vmatpush1.bf16.msra.mxu0 %v866
    %895 = vmatprep.subr.bf16.mxu0 0
    %896 = vmatpush1.bf16.msra.mxu0 %v865
    %897 = vmatprep.subr.bf16.mxu0 0
    %898 = vmatpush2.bf16.msra.mxu0 0
    %899 = vmatprep.subr.bf16.mxu0 0
    %900 = vmatpush2.bf16.msra.mxu0 0
    %901 = vmatprep.subr.bf16.mxu0 0
    %902 = vmatpush2.bf16.msra.mxu0 0
    %903 = vmatprep.subr.bf16.mxu0 0
    %904 = vmatpush2.bf16.msra.mxu0 0
    %905 = vmatprep.subr.bf16.mxu0 0
    %906 = vmatpush2.bf16.msra.mxu0 0
    %907 = vmatprep.subr.bf16.mxu0 0
    %908 = vmatpush2.bf16.msra.mxu0 0
    %909 = vmatprep.subr.bf16.mxu0 0
    %910 = vmatpush2.bf16.msra.mxu0 0
    %911 = vmatprep.subr.bf16.mxu0 0
    %912 = vmatpush2.bf16.msra.mxu0 0
    %913 = vmatprep.mubr.bf16.mxu0 0
    %914 = vmatmul.mubr.bf16.gmra.mxu0 %v826
    %v915 = vpop.f32.mrf.mxu0
    %v916 = vadd.f32 %v831, %v915
    %v917 = vpop.f32.mrf.mxu0
    %v918 = vpop.f32.mrf.mxu0
    %v919 = vadd.f32 %v831, %v918
    %v920 = vpop.f32.mrf.mxu0
    %921 = vdwg.mxu0
    %v922 = vlaneseq
    %v923 = vand.u32 %v922, 127
    %vm924 = vcmp.lt.s32.totalorder %v923, 32
    %v925 = vsel %vm924, %v916, 0.0
    %v926 = vsel %vm924, %v919, 0.0
    %v927 = vmul.f32 %v925, %v925
    %v928 = vmul.f32 %v926, %v926
    %929 = vadd.xlane.f32.xlu0 %v927
    %v930 = vpop.xlane.xlu0 %929
    %931 = vadd.xlane.f32.xlu0 %v928
    %v932 = vpop.xlane.xlu0 %931
    %v933 = vadd.f32 %v930, 1e-12
    %v934 = vadd.f32 %v932, 1e-12
    %v935 = vrsqrt.pop %v933
    %v936 = vrsqrt.pop %v934
    %v937 = vmul.f32 %v925, %v935
    %v938 = vmul.f32 %v926, %v936
    %vm939 = vcmp.eq.s32.totalorder %v923, 32
    %v940 = vsel %vm939, %v916, 0.0
    %v941 = vsel %vm939, %v919, 0.0
    %942 = vadd.xlane.f32.xlu0 %v940
    %v943 = vpop.xlane.xlu0 %942
    %944 = vadd.xlane.f32.xlu0 %v941
    %v945 = vpop.xlane.xlu0 %944
    %v946 = vmax.f32 %v943, 0.0
    %v947 = vmax.f32 %v945, 0.0
    %vm948 = vcmp.ne.f32.partialorder %v943, %v943
    %vm949 = vcmp.ne.f32.partialorder %v945, %v945
    %v950 = vadd.f32 %v943, 0.0
    %v951 = vadd.f32 %v945, 0.0
    %v952 = vand.u32 2147483647, %v943
    %v953 = vand.u32 2147483647, %v945
    %v954 = vsub.f32 0.0, %v952
    %v955 = vsub.f32 0.0, %v953
    %v956 = vmul.f32 %v954, 1.442695
    %v957 = vpow.pop %v956
    %v958 = vmul.f32 %v955, 1.442695
    %v959 = vpow.pop %v958
    %v960 = vadd.f32 %v957, 1.0
    %v961 = vlog2.pop %v960
    %v962 = vmul.f32 %v961, 0.6931472
    %v963 = vmul.f32 -0.5, %v957
    %v964 = vadd.f32 %v963, 1.0
    %v965 = vmul.f32 %v964, %v957
    %v966 = vand.u32 2147483647, %v957
    %vm967 = vcmp.lt.f32.partialorder %v966, 0.0004427343
    %v968 = vsel %vm967, %v965, %v962
    %v969 = vadd.f32 %v959, 1.0
    %v970 = vlog2.pop %v969
    %v971 = vmul.f32 %v970, 0.6931472
    %v972 = vmul.f32 -0.5, %v959
    %v973 = vadd.f32 %v972, 1.0
    %v974 = vmul.f32 %v973, %v959
    %v975 = vand.u32 2147483647, %v959
    %vm976 = vcmp.lt.f32.partialorder %v975, 0.0004427343
    %v977 = vsel %vm976, %v974, %v971
    %v978 = vadd.f32 %v946, %v968
    %v979 = vadd.f32 %v947, %v977
    %v980 = vsel %vm948, %v950, %v978
    %v981 = vsel %vm949, %v951, %v979
    %v982 = vadd.f32 %v980, 1.0
    %v983 = vadd.f32 %v981, 1.0
    %v984 = vsel %vm939, %v982, 0.0
    %v985 = vsel %vm939, %v983, 0.0
    %v986 = vsel %vm924, %v937, %v984
    %v987 = vsel %vm924, %v938, %v985
    %v988 = vld [vmem:[#allocation4] sm:$0xf]
    %v989 = vld [vmem:[#allocation4 + $0x4] sm:$0xf]
    %v990 = vld [vmem:[#allocation4 + $0x8] sm:$0xf]
    %v991 = vld [vmem:[#allocation4 + $0xc] sm:$0xf]
    %v992 = vld [vmem:[#allocation4 + $0x10] sm:$0xf]
    %v993 = vld [vmem:[#allocation4 + $0x14] sm:$0xf]
    %v994 = vld [vmem:[#allocation4 + $0x18] sm:$0xf]
    %v995 = vld [vmem:[#allocation4 + $0x1c] sm:$0xf]
    %v996 = vld [vmem:[#allocation4 + $0x20] sm:$0xf]
    %v997 = vld [vmem:[#allocation4 + $0x24] sm:$0xf]
    %v998 = vld [vmem:[#allocation4 + $0x28] sm:$0xf]
    %v999 = vld [vmem:[#allocation4 + $0x2c] sm:$0xf]
    %v1000 = vld [vmem:[#allocation4 + $0x30] sm:$0xf]
    %v1001 = vld [vmem:[#allocation4 + $0x34] sm:$0xf]
    %v1002 = vld [vmem:[#allocation4 + $0x38] sm:$0xf]
    %v1003 = vld [vmem:[#allocation4 + $0x3c] sm:$0xf]
    %v1004 = vld [vmem:[%s6] sm:$0x1]
    %v1005 = vld [vmem:[#allocation6] sm:$0xff]
    %v1006 = vld [vmem:[#allocation6 + $0x8] sm:$0xff]
    %v1007 = vld [vmem:[#allocation6 + $0x10] sm:$0xff]
    %v1008 = vld [vmem:[#allocation6 + $0x18] sm:$0xff]
    %v1009 = vld [vmem:[#allocation6 + $0x20] sm:$0xff]
    %v1010 = vld [vmem:[#allocation6 + $0x28] sm:$0xff]
    %v1011 = vld [vmem:[#allocation6 + $0x30] sm:$0xff]
    %v1012 = vld [vmem:[#allocation6 + $0x38] sm:$0xff]
    %v1013 = vld [vmem:[#allocation6 + $0x40] sm:$0xff]
    %v1014 = vld [vmem:[#allocation6 + $0x48] sm:$0xff]
    %v1015 = vld [vmem:[#allocation6 + $0x50] sm:$0xff]
    %v1016 = vld [vmem:[#allocation6 + $0x58] sm:$0xff]
    %v1017 = vld [vmem:[#allocation6 + $0x60] sm:$0xff]
    %v1018 = vld [vmem:[#allocation6 + $0x68] sm:$0xff]
    %v1019 = vld [vmem:[#allocation6 + $0x70] sm:$0xff]
    %v1020 = vld [vmem:[#allocation6 + $0x78] sm:$0xff]
    %v1021 = vld [vmem:[#allocation6 + $0x80] sm:$0xff]
    %v1022 = vld [vmem:[#allocation6 + $0x88] sm:$0xff]
    %v1023 = vld [vmem:[#allocation6 + $0x90] sm:$0xff]
    %v1024 = vld [vmem:[#allocation6 + $0x98] sm:$0xff]
    %v1025 = vld [vmem:[#allocation6 + $0xa0] sm:$0xff]
    %v1026 = vld [vmem:[#allocation6 + $0xa8] sm:$0xff]
    %v1027 = vld [vmem:[#allocation6 + $0xb0] sm:$0xff]
    %v1028 = vld [vmem:[#allocation6 + $0xb8] sm:$0xff]
    %v1029 = vld [vmem:[#allocation6 + $0xc0] sm:$0xff]
    %v1030 = vld [vmem:[#allocation6 + $0xc8] sm:$0xff]
    %v1031 = vld [vmem:[#allocation6 + $0xd0] sm:$0xff]
    %v1032 = vld [vmem:[#allocation6 + $0xd8] sm:$0xff]
    %v1033 = vld [vmem:[#allocation6 + $0xe0] sm:$0xff]
    %v1034 = vld [vmem:[#allocation6 + $0xe8] sm:$0xff]
    %v1035 = vld [vmem:[#allocation6 + $0xf0] sm:$0xff]
    %v1036 = vld [vmem:[#allocation6 + $0xf8] sm:$0xff]
    %v1037 = vld [vmem:[#allocation6 + $0x100] sm:$0xff]
    %v1038 = vld [vmem:[#allocation6 + $0x108] sm:$0xff]
    %v1039 = vld [vmem:[#allocation6 + $0x110] sm:$0xff]
    %v1040 = vld [vmem:[#allocation6 + $0x118] sm:$0xff]
    %v1041 = vld [vmem:[#allocation6 + $0x120] sm:$0xff]
    %v1042 = vld [vmem:[#allocation6 + $0x128] sm:$0xff]
    %v1043 = vld [vmem:[#allocation6 + $0x130] sm:$0xff]
    %v1044 = vld [vmem:[#allocation6 + $0x138] sm:$0xff]
    %v1045 = vld [vmem:[#allocation6 + $0x140] sm:$0xff]
    %v1046 = vld [vmem:[#allocation6 + $0x148] sm:$0xff]
    %v1047 = vld [vmem:[#allocation6 + $0x150] sm:$0xff]
    %v1048 = vld [vmem:[#allocation6 + $0x158] sm:$0xff]
    %v1049 = vld [vmem:[#allocation6 + $0x160] sm:$0xff]
    %v1050 = vld [vmem:[#allocation6 + $0x168] sm:$0xff]
    %v1051 = vld [vmem:[#allocation6 + $0x170] sm:$0xff]
    %v1052 = vld [vmem:[#allocation6 + $0x178] sm:$0xff]
    %v1053 = vld [vmem:[#allocation6 + $0x180] sm:$0xff]
    %v1054 = vld [vmem:[#allocation6 + $0x188] sm:$0xff]
    %v1055 = vld [vmem:[#allocation6 + $0x190] sm:$0xff]
    %v1056 = vld [vmem:[#allocation6 + $0x198] sm:$0xff]
    %v1057 = vld [vmem:[#allocation6 + $0x1a0] sm:$0xff]
    %v1058 = vld [vmem:[#allocation6 + $0x1a8] sm:$0xff]
    %v1059 = vld [vmem:[#allocation6 + $0x1b0] sm:$0xff]
    %v1060 = vld [vmem:[#allocation6 + $0x1b8] sm:$0xff]
    %v1061 = vld [vmem:[#allocation6 + $0x1c0] sm:$0xff]
    %v1062 = vld [vmem:[#allocation6 + $0x1c8] sm:$0xff]
    %v1063 = vld [vmem:[#allocation6 + $0x1d0] sm:$0xff]
    %v1064 = vld [vmem:[#allocation6 + $0x1d8] sm:$0xff]
    %v1065 = vld [vmem:[#allocation6 + $0x1e0] sm:$0xff]
    %v1066 = vld [vmem:[#allocation6 + $0x1e8] sm:$0xff]
    %v1067 = vld [vmem:[#allocation6 + $0x1f0] sm:$0xff]
    %v1068 = vld [vmem:[#allocation6 + $0x1f8] sm:$0xff]
    %v1069 = vld [vmem:[%s8] sm:$0xff]
    %v1070 = vpack.c.bf16 %v938, %v937
    %v1072 = vlaneseq
    %v1073 = vshrl.u32 %v1072, 7
    %v1074 = vsub.s32 0, %v1073
    %v1075 = vrot.slane %v1004, %v1074
    %v1093 = vunpack.c.l.b16 %v988
    %v1094 = vunpack.c.l.b16 %v989
    %v1095 = vunpack.c.l.b16 %v990
    %v1096 = vunpack.c.l.b16 %v991
    %v1097 = vunpack.c.l.b16 %v992
    %v1098 = vunpack.c.l.b16 %v993
    %v1099 = vunpack.c.l.b16 %v994
    %v1100 = vunpack.c.l.b16 %v995
    %v1101 = vunpack.c.l.b16 %v996
    %v1102 = vunpack.c.l.b16 %v997
    %v1103 = vunpack.c.l.b16 %v998
    %v1104 = vunpack.c.l.b16 %v999
    %v1105 = vunpack.c.l.b16 %v1000
    %v1106 = vunpack.c.l.b16 %v1001
    %v1107 = vunpack.c.l.b16 %v1002
    %v1108 = vunpack.c.l.b16 %v1003
    %v1109 = vpack.c.b16 %v1094, %v1093
    %v1110 = vpack.c.b16 %v1096, %v1095
    %v1111 = vpack.c.b16 %v1098, %v1097
    %v1112 = vpack.c.b16 %v1100, %v1099
    %v1113 = vpack.c.b16 %v1102, %v1101
    %v1114 = vpack.c.b16 %v1104, %v1103
    %v1115 = vpack.c.b16 %v1106, %v1105
    %v1116 = vpack.c.b16 %v1108, %v1107
    %1125 = vmatprep.subr.bf16.mxu0 0
    %1126 = vmatpush1.bf16.msra.mxu0 %v1116
    %1127 = vmatprep.subr.bf16.mxu0 0
    %1128 = vmatpush1.bf16.msra.mxu0 %v1115
    %1129 = vmatprep.subr.bf16.mxu0 0
    %1130 = vmatpush1.bf16.msra.mxu0 %v1114
    %1131 = vmatprep.subr.bf16.mxu0 0
    %1132 = vmatpush1.bf16.msra.mxu0 %v1113
    %1133 = vmatprep.subr.bf16.mxu0 0
    %1134 = vmatpush1.bf16.msra.mxu0 %v1112
    %1135 = vmatprep.subr.bf16.mxu0 0
    %1136 = vmatpush1.bf16.msra.mxu0 %v1111
    %1137 = vmatprep.subr.bf16.mxu0 0
    %1138 = vmatpush1.bf16.msra.mxu0 %v1110
    %1139 = vmatprep.subr.bf16.mxu0 0
    %1140 = vmatpush1.bf16.msra.mxu0 %v1109
    %1141 = vmatprep.subr.bf16.mxu0 0
    %1142 = vmatpush2.bf16.msra.mxu0 0
    %1143 = vmatprep.subr.bf16.mxu0 0
    %1144 = vmatpush2.bf16.msra.mxu0 0
    %1145 = vmatprep.subr.bf16.mxu0 0
    %1146 = vmatpush2.bf16.msra.mxu0 0
    %1147 = vmatprep.subr.bf16.mxu0 0
    %1148 = vmatpush2.bf16.msra.mxu0 0
    %1149 = vmatprep.subr.bf16.mxu0 0
    %1150 = vmatpush2.bf16.msra.mxu0 0
    %1151 = vmatprep.subr.bf16.mxu0 0
    %1152 = vmatpush2.bf16.msra.mxu0 0
    %1153 = vmatprep.subr.bf16.mxu0 0
    %1154 = vmatpush2.bf16.msra.mxu0 0
    %1155 = vmatprep.subr.bf16.mxu0 0
    %1156 = vmatpush2.bf16.msra.mxu0 0
    %1157 = vmatprep.mubr.bf16.mxu0 0
    %1158 = vmatmul.mubr.bf16.gmra.mxu0 %v1070
    %v1159 = vpop.f32.mrf.mxu0
    %v1160 = vadd.f32 %v1075, %v1159
    %v1161 = vpop.f32.mrf.mxu0
    %v1162 = vpop.f32.mrf.mxu0
    %v1163 = vadd.f32 %v1075, %v1162
    %v1164 = vpop.f32.mrf.mxu0
    %1165 = vdwg.mxu0
    %v1166 = vmax.f32 %v1160, 0.0
    %v1167 = vmax.f32 %v1163, 0.0
    %v1168 = vpack.c.bf16 %v1167, %v1166
    %v1170 = vlaneseq
    %v1171 = vshrl.u32 %v1170, 7
    %v1172 = vsub.s32 0, %v1171
    %v1173 = vrot.slane %v1069, %v1172
    %v1174 = vlaneseq
    %v1175 = vshrl.u32 %v1174, 7
    %v1176 = vsub.s32 1, %v1175
    %v1177 = vrot.slane %v1069, %v1176
    %v1178 = vlaneseq
    %v1179 = vshrl.u32 %v1178, 7
    %v1180 = vsub.s32 2, %v1179
    %v1181 = vrot.slane %v1069, %v1180
    %v1182 = vlaneseq
    %v1183 = vshrl.u32 %v1182, 7
    %v1184 = vsub.s32 3, %v1183
    %v1185 = vrot.slane %v1069, %v1184
    %v1186 = vlaneseq
    %v1187 = vshrl.u32 %v1186, 7
    %v1188 = vsub.s32 4, %v1187
    %v1189 = vrot.slane %v1069, %v1188
    %v1190 = vlaneseq
    %v1191 = vshrl.u32 %v1190, 7
    %v1192 = vsub.s32 5, %v1191
    %v1193 = vrot.slane %v1069, %v1192
    %v1194 = vlaneseq
    %v1195 = vshrl.u32 %v1194, 7
    %v1196 = vsub.s32 6, %v1195
    %v1197 = vrot.slane %v1069, %v1196
    %v1198 = vlaneseq
    %v1199 = vshrl.u32 %v1198, 7
    %v1200 = vsub.s32 7, %v1199
    %v1201 = vrot.slane %v1069, %v1200
    %v1274 = vunpack.c.l.b16 %v1005
    %v1275 = vunpack.c.h.b16 %v1005
    %v1276 = vunpack.c.l.b16 %v1006
    %v1277 = vunpack.c.h.b16 %v1006
    %v1278 = vunpack.c.l.b16 %v1007
    %v1279 = vunpack.c.h.b16 %v1007
    %v1280 = vunpack.c.l.b16 %v1008
    %v1281 = vunpack.c.h.b16 %v1008
    %v1282 = vunpack.c.l.b16 %v1009
    %v1283 = vunpack.c.h.b16 %v1009
    %v1284 = vunpack.c.l.b16 %v1010
    %v1285 = vunpack.c.h.b16 %v1010
    %v1286 = vunpack.c.l.b16 %v1011
    %v1287 = vunpack.c.h.b16 %v1011
    %v1288 = vunpack.c.l.b16 %v1012
    %v1289 = vunpack.c.h.b16 %v1012
    %v1290 = vunpack.c.l.b16 %v1013
    %v1291 = vunpack.c.h.b16 %v1013
    %v1292 = vunpack.c.l.b16 %v1014
    %v1293 = vunpack.c.h.b16 %v1014
    %v1294 = vunpack.c.l.b16 %v1015
    %v1295 = vunpack.c.h.b16 %v1015
    %v1296 = vunpack.c.l.b16 %v1016
    %v1297 = vunpack.c.h.b16 %v1016
    %v1298 = vunpack.c.l.b16 %v1017
    %v1299 = vunpack.c.h.b16 %v1017
    %v1300 = vunpack.c.l.b16 %v1018
    %v1301 = vunpack.c.h.b16 %v1018
    %v1302 = vunpack.c.l.b16 %v1019
    %v1303 = vunpack.c.h.b16 %v1019
    %v1304 = vunpack.c.l.b16 %v1020
    %v1305 = vunpack.c.h.b16 %v1020
    %v1306 = vunpack.c.l.b16 %v1021
    %v1307 = vunpack.c.h.b16 %v1021
    %v1308 = vunpack.c.l.b16 %v1022
    %v1309 = vunpack.c.h.b16 %v1022
    %v1310 = vunpack.c.l.b16 %v1023
    %v1311 = vunpack.c.h.b16 %v1023
    %v1312 = vunpack.c.l.b16 %v1024
    %v1313 = vunpack.c.h.b16 %v1024
    %v1314 = vunpack.c.l.b16 %v1025
    %v1315 = vunpack.c.h.b16 %v1025
    %v1316 = vunpack.c.l.b16 %v1026
    %v1317 = vunpack.c.h.b16 %v1026
    %v1318 = vunpack.c.l.b16 %v1027
    %v1319 = vunpack.c.h.b16 %v1027
    %v1320 = vunpack.c.l.b16 %v1028
    %v1321 = vunpack.c.h.b16 %v1028
    %v1322 = vunpack.c.l.b16 %v1029
    %v1323 = vunpack.c.h.b16 %v1029
    %v1324 = vunpack.c.l.b16 %v1030
    %v1325 = vunpack.c.h.b16 %v1030
    %v1326 = vunpack.c.l.b16 %v1031
    %v1327 = vunpack.c.h.b16 %v1031
    %v1328 = vunpack.c.l.b16 %v1032
    %v1329 = vunpack.c.h.b16 %v1032
    %v1330 = vunpack.c.l.b16 %v1033
    %v1331 = vunpack.c.h.b16 %v1033
    %v1332 = vunpack.c.l.b16 %v1034
    %v1333 = vunpack.c.h.b16 %v1034
    %v1334 = vunpack.c.l.b16 %v1035
    %v1335 = vunpack.c.h.b16 %v1035
    %v1336 = vunpack.c.l.b16 %v1036
    %v1337 = vunpack.c.h.b16 %v1036
    %v1338 = vunpack.c.l.b16 %v1037
    %v1339 = vunpack.c.h.b16 %v1037
    %v1340 = vunpack.c.l.b16 %v1038
    %v1341 = vunpack.c.h.b16 %v1038
    %v1342 = vunpack.c.l.b16 %v1039
    %v1343 = vunpack.c.h.b16 %v1039
    %v1344 = vunpack.c.l.b16 %v1040
    %v1345 = vunpack.c.h.b16 %v1040
    %v1346 = vunpack.c.l.b16 %v1041
    %v1347 = vunpack.c.h.b16 %v1041
    %v1348 = vunpack.c.l.b16 %v1042
    %v1349 = vunpack.c.h.b16 %v1042
    %v1350 = vunpack.c.l.b16 %v1043
    %v1351 = vunpack.c.h.b16 %v1043
    %v1352 = vunpack.c.l.b16 %v1044
    %v1353 = vunpack.c.h.b16 %v1044
    %v1354 = vunpack.c.l.b16 %v1045
    %v1355 = vunpack.c.h.b16 %v1045
    %v1356 = vunpack.c.l.b16 %v1046
    %v1357 = vunpack.c.h.b16 %v1046
    %v1358 = vunpack.c.l.b16 %v1047
    %v1359 = vunpack.c.h.b16 %v1047
    %v1360 = vunpack.c.l.b16 %v1048
    %v1361 = vunpack.c.h.b16 %v1048
    %v1362 = vunpack.c.l.b16 %v1049
    %v1363 = vunpack.c.h.b16 %v1049
    %v1364 = vunpack.c.l.b16 %v1050
    %v1365 = vunpack.c.h.b16 %v1050
    %v1366 = vunpack.c.l.b16 %v1051
    %v1367 = vunpack.c.h.b16 %v1051
    %v1368 = vunpack.c.l.b16 %v1052
    %v1369 = vunpack.c.h.b16 %v1052
    %v1370 = vunpack.c.l.b16 %v1053
    %v1371 = vunpack.c.h.b16 %v1053
    %v1372 = vunpack.c.l.b16 %v1054
    %v1373 = vunpack.c.h.b16 %v1054
    %v1374 = vunpack.c.l.b16 %v1055
    %v1375 = vunpack.c.h.b16 %v1055
    %v1376 = vunpack.c.l.b16 %v1056
    %v1377 = vunpack.c.h.b16 %v1056
    %v1378 = vunpack.c.l.b16 %v1057
    %v1379 = vunpack.c.h.b16 %v1057
    %v1380 = vunpack.c.l.b16 %v1058
    %v1381 = vunpack.c.h.b16 %v1058
    %v1382 = vunpack.c.l.b16 %v1059
    %v1383 = vunpack.c.h.b16 %v1059
    %v1384 = vunpack.c.l.b16 %v1060
    %v1385 = vunpack.c.h.b16 %v1060
    %v1386 = vunpack.c.l.b16 %v1061
    %v1387 = vunpack.c.h.b16 %v1061
    %v1388 = vunpack.c.l.b16 %v1062
    %v1389 = vunpack.c.h.b16 %v1062
    %v1390 = vunpack.c.l.b16 %v1063
    %v1391 = vunpack.c.h.b16 %v1063
    %v1392 = vunpack.c.l.b16 %v1064
    %v1393 = vunpack.c.h.b16 %v1064
    %v1394 = vunpack.c.l.b16 %v1065
    %v1395 = vunpack.c.h.b16 %v1065
    %v1396 = vunpack.c.l.b16 %v1066
    %v1397 = vunpack.c.h.b16 %v1066
    %v1398 = vunpack.c.l.b16 %v1067
    %v1399 = vunpack.c.h.b16 %v1067
    %v1400 = vunpack.c.l.b16 %v1068
    %v1401 = vunpack.c.h.b16 %v1068
    %v1402 = vpack.c.b16 %v1282, %v1274
    %v1403 = vpack.c.b16 %v1283, %v1275
    %v1404 = vpack.c.b16 %v1284, %v1276
    %v1405 = vpack.c.b16 %v1285, %v1277
    %v1406 = vpack.c.b16 %v1286, %v1278
    %v1407 = vpack.c.b16 %v1287, %v1279
    %v1408 = vpack.c.b16 %v1288, %v1280
    %v1409 = vpack.c.b16 %v1289, %v1281
    %v1410 = vpack.c.b16 %v1298, %v1290
    %v1411 = vpack.c.b16 %v1299, %v1291
    %v1412 = vpack.c.b16 %v1300, %v1292
    %v1413 = vpack.c.b16 %v1301, %v1293
    %v1414 = vpack.c.b16 %v1302, %v1294
    %v1415 = vpack.c.b16 %v1303, %v1295
    %v1416 = vpack.c.b16 %v1304, %v1296
    %v1417 = vpack.c.b16 %v1305, %v1297
    %v1418 = vpack.c.b16 %v1314, %v1306
    %v1419 = vpack.c.b16 %v1315, %v1307
    %v1420 = vpack.c.b16 %v1316, %v1308
    %v1421 = vpack.c.b16 %v1317, %v1309
    %v1422 = vpack.c.b16 %v1318, %v1310
    %v1423 = vpack.c.b16 %v1319, %v1311
    %v1424 = vpack.c.b16 %v1320, %v1312
    %v1425 = vpack.c.b16 %v1321, %v1313
    %v1426 = vpack.c.b16 %v1330, %v1322
    %v1427 = vpack.c.b16 %v1331, %v1323
    %v1428 = vpack.c.b16 %v1332, %v1324
    %v1429 = vpack.c.b16 %v1333, %v1325
    %v1430 = vpack.c.b16 %v1334, %v1326
    %v1431 = vpack.c.b16 %v1335, %v1327
    %v1432 = vpack.c.b16 %v1336, %v1328
    %v1433 = vpack.c.b16 %v1337, %v1329
    %v1434 = vpack.c.b16 %v1346, %v1338
    %v1435 = vpack.c.b16 %v1347, %v1339
    %v1436 = vpack.c.b16 %v1348, %v1340
    %v1437 = vpack.c.b16 %v1349, %v1341
    %v1438 = vpack.c.b16 %v1350, %v1342
    %v1439 = vpack.c.b16 %v1351, %v1343
    %v1440 = vpack.c.b16 %v1352, %v1344
    %v1441 = vpack.c.b16 %v1353, %v1345
    %v1442 = vpack.c.b16 %v1362, %v1354
    %v1443 = vpack.c.b16 %v1363, %v1355
    %v1444 = vpack.c.b16 %v1364, %v1356
    %v1445 = vpack.c.b16 %v1365, %v1357
    %v1446 = vpack.c.b16 %v1366, %v1358
    %v1447 = vpack.c.b16 %v1367, %v1359
    %v1448 = vpack.c.b16 %v1368, %v1360
    %v1449 = vpack.c.b16 %v1369, %v1361
    %v1450 = vpack.c.b16 %v1378, %v1370
    %v1451 = vpack.c.b16 %v1379, %v1371
    %v1452 = vpack.c.b16 %v1380, %v1372
    %v1453 = vpack.c.b16 %v1381, %v1373
    %v1454 = vpack.c.b16 %v1382, %v1374
    %v1455 = vpack.c.b16 %v1383, %v1375
    %v1456 = vpack.c.b16 %v1384, %v1376
    %v1457 = vpack.c.b16 %v1385, %v1377
    %v1458 = vpack.c.b16 %v1394, %v1386
    %v1459 = vpack.c.b16 %v1395, %v1387
    %v1460 = vpack.c.b16 %v1396, %v1388
    %v1461 = vpack.c.b16 %v1397, %v1389
    %v1462 = vpack.c.b16 %v1398, %v1390
    %v1463 = vpack.c.b16 %v1399, %v1391
    %v1464 = vpack.c.b16 %v1400, %v1392
    %v1465 = vpack.c.b16 %v1401, %v1393
    %1530 = vmatprep.subr.bf16.mxu0 %v1459
    %1531 = vmatpush1.bf16.msra.mxu0 %v1458
    %1532 = vmatprep.subr.bf16.mxu0 %v1451
    %1533 = vmatpush1.bf16.msra.mxu0 %v1450
    %1534 = vmatprep.subr.bf16.mxu0 %v1443
    %1535 = vmatpush1.bf16.msra.mxu0 %v1442
    %1536 = vmatprep.subr.bf16.mxu0 %v1435
    %1537 = vmatpush1.bf16.msra.mxu0 %v1434
    %1538 = vmatprep.subr.bf16.mxu0 %v1427
    %1539 = vmatpush1.bf16.msra.mxu0 %v1426
    %1540 = vmatprep.subr.bf16.mxu0 %v1419
    %1541 = vmatpush1.bf16.msra.mxu0 %v1418
    %1542 = vmatprep.subr.bf16.mxu0 %v1411
    %1543 = vmatpush1.bf16.msra.mxu0 %v1410
    %1544 = vmatprep.subr.bf16.mxu0 %v1403
    %1545 = vmatpush1.bf16.msra.mxu0 %v1402
    %1546 = vmatprep.subr.bf16.mxu0 0
    %1547 = vmatpush2.bf16.msra.mxu0 0
    %1548 = vmatprep.subr.bf16.mxu0 0
    %1549 = vmatpush2.bf16.msra.mxu0 0
    %1550 = vmatprep.subr.bf16.mxu0 0
    %1551 = vmatpush2.bf16.msra.mxu0 0
    %1552 = vmatprep.subr.bf16.mxu0 0
    %1553 = vmatpush2.bf16.msra.mxu0 0
    %1554 = vmatprep.subr.bf16.mxu0 0
    %1555 = vmatpush2.bf16.msra.mxu0 0
    %1556 = vmatprep.subr.bf16.mxu0 0
    %1557 = vmatpush2.bf16.msra.mxu0 0
    %1558 = vmatprep.subr.bf16.mxu0 0
    %1559 = vmatpush2.bf16.msra.mxu0 0
    %1560 = vmatprep.subr.bf16.mxu0 0
    %1561 = vmatpush2.bf16.msra.mxu0 0
    %1562 = vmatprep.mubr.bf16.mxu0 0
    %1563 = vmatmul.mubr.bf16.gmra.mxu0 %v1168
    %v1564 = vpop.f32.mrf.mxu0
    %v1565 = vadd.f32 %v1173, %v1564
    %v1566 = vpop.f32.mrf.mxu0
    %v1567 = vadd.f32 %v1177, %v1566
    %v1568 = vpop.f32.mrf.mxu0
    %v1569 = vadd.f32 %v1173, %v1568
    %v1570 = vpop.f32.mrf.mxu0
    %v1571 = vadd.f32 %v1177, %v1570
    %1572 = vdwg.mxu0
    %1573 = vmatprep.subr.bf16.mxu0 %v1461
    %1574 = vmatpush1.bf16.msra.mxu0 %v1460
    %1575 = vmatprep.subr.bf16.mxu0 %v1453
    %1576 = vmatpush1.bf16.msra.mxu0 %v1452
    %1577 = vmatprep.subr.bf16.mxu0 %v1445
    %1578 = vmatpush1.bf16.msra.mxu0 %v1444
    %1579 = vmatprep.subr.bf16.mxu0 %v1437
    %1580 = vmatpush1.bf16.msra.mxu0 %v1436
    %1581 = vmatprep.subr.bf16.mxu0 %v1429
    %1582 = vmatpush1.bf16.msra.mxu0 %v1428
    %1583 = vmatprep.subr.bf16.mxu0 %v1421
    %1584 = vmatpush1.bf16.msra.mxu0 %v1420
    %1585 = vmatprep.subr.bf16.mxu0 %v1413
    %1586 = vmatpush1.bf16.msra.mxu0 %v1412
    %1587 = vmatprep.subr.bf16.mxu0 %v1405
    %1588 = vmatpush1.bf16.msra.mxu0 %v1404
    %1589 = vmatprep.subr.bf16.mxu0 0
    %1590 = vmatpush2.bf16.msra.mxu0 0
    %1591 = vmatprep.subr.bf16.mxu0 0
    %1592 = vmatpush2.bf16.msra.mxu0 0
    %1593 = vmatprep.subr.bf16.mxu0 0
    %1594 = vmatpush2.bf16.msra.mxu0 0
    %1595 = vmatprep.subr.bf16.mxu0 0
    %1596 = vmatpush2.bf16.msra.mxu0 0
    %1597 = vmatprep.subr.bf16.mxu0 0
    %1598 = vmatpush2.bf16.msra.mxu0 0
    %1599 = vmatprep.subr.bf16.mxu0 0
    %1600 = vmatpush2.bf16.msra.mxu0 0
    %1601 = vmatprep.subr.bf16.mxu0 0
    %1602 = vmatpush2.bf16.msra.mxu0 0
    %1603 = vmatprep.subr.bf16.mxu0 0
    %1604 = vmatpush2.bf16.msra.mxu0 0
    %1605 = vmatprep.mubr.bf16.mxu0 0
    %1606 = vmatmul.mubr.bf16.gmra.mxu0 %v1168
    %v1607 = vpop.f32.mrf.mxu0
    %v1608 = vadd.f32 %v1181, %v1607
    %v1609 = vpop.f32.mrf.mxu0
    %v1610 = vadd.f32 %v1185, %v1609
    %v1611 = vpop.f32.mrf.mxu0
    %v1612 = vadd.f32 %v1181, %v1611
    %v1613 = vpop.f32.mrf.mxu0
    %v1614 = vadd.f32 %v1185, %v1613
    %1615 = vdwg.mxu0
    %1616 = vmatprep.subr.bf16.mxu0 %v1463
    %1617 = vmatpush1.bf16.msra.mxu0 %v1462
    %1618 = vmatprep.subr.bf16.mxu0 %v1455
    %1619 = vmatpush1.bf16.msra.mxu0 %v1454
    %1620 = vmatprep.subr.bf16.mxu0 %v1447
    %1621 = vmatpush1.bf16.msra.mxu0 %v1446
    %1622 = vmatprep.subr.bf16.mxu0 %v1439
    %1623 = vmatpush1.bf16.msra.mxu0 %v1438
    %1624 = vmatprep.subr.bf16.mxu0 %v1431
    %1625 = vmatpush1.bf16.msra.mxu0 %v1430
    %1626 = vmatprep.subr.bf16.mxu0 %v1423
    %1627 = vmatpush1.bf16.msra.mxu0 %v1422
    %1628 = vmatprep.subr.bf16.mxu0 %v1415
    %1629 = vmatpush1.bf16.msra.mxu0 %v1414
    %1630 = vmatprep.subr.bf16.mxu0 %v1407
    %1631 = vmatpush1.bf16.msra.mxu0 %v1406
    %1632 = vmatprep.subr.bf16.mxu0 0
    %1633 = vmatpush2.bf16.msra.mxu0 0
    %1634 = vmatprep.subr.bf16.mxu0 0
    %1635 = vmatpush2.bf16.msra.mxu0 0
    %1636 = vmatprep.subr.bf16.mxu0 0
    %1637 = vmatpush2.bf16.msra.mxu0 0
    %1638 = vmatprep.subr.bf16.mxu0 0
    %1639 = vmatpush2.bf16.msra.mxu0 0
    %1640 = vmatprep.subr.bf16.mxu0 0
    %1641 = vmatpush2.bf16.msra.mxu0 0
    %1642 = vmatprep.subr.bf16.mxu0 0
    %1643 = vmatpush2.bf16.msra.mxu0 0
    %1644 = vmatprep.subr.bf16.mxu0 0
    %1645 = vmatpush2.bf16.msra.mxu0 0
    %1646 = vmatprep.subr.bf16.mxu0 0
    %1647 = vmatpush2.bf16.msra.mxu0 0
    %1648 = vmatprep.mubr.bf16.mxu0 0
    %1649 = vmatmul.mubr.bf16.gmra.mxu0 %v1168
    %v1650 = vpop.f32.mrf.mxu0
    %v1651 = vadd.f32 %v1189, %v1650
    %v1652 = vpop.f32.mrf.mxu0
    %v1653 = vadd.f32 %v1193, %v1652
    %v1654 = vpop.f32.mrf.mxu0
    %v1655 = vadd.f32 %v1189, %v1654
    %v1656 = vpop.f32.mrf.mxu0
    %v1657 = vadd.f32 %v1193, %v1656
    %1658 = vdwg.mxu0
    %1659 = vmatprep.subr.bf16.mxu0 %v1465
    %1660 = vmatpush1.bf16.msra.mxu0 %v1464
    %1661 = vmatprep.subr.bf16.mxu0 %v1457
    %1662 = vmatpush1.bf16.msra.mxu0 %v1456
    %1663 = vmatprep.subr.bf16.mxu0 %v1449
    %1664 = vmatpush1.bf16.msra.mxu0 %v1448
    %1665 = vmatprep.subr.bf16.mxu0 %v1441
    %1666 = vmatpush1.bf16.msra.mxu0 %v1440
    %1667 = vmatprep.subr.bf16.mxu0 %v1433
    %1668 = vmatpush1.bf16.msra.mxu0 %v1432
    %1669 = vmatprep.subr.bf16.mxu0 %v1425
    %1670 = vmatpush1.bf16.msra.mxu0 %v1424
    %1671 = vmatprep.subr.bf16.mxu0 %v1417
    %1672 = vmatpush1.bf16.msra.mxu0 %v1416
    %1673 = vmatprep.subr.bf16.mxu0 %v1409
    %1674 = vmatpush1.bf16.msra.mxu0 %v1408
    %1675 = vmatprep.subr.bf16.mxu0 0
    %1676 = vmatpush2.bf16.msra.mxu0 0
    %1677 = vmatprep.subr.bf16.mxu0 0
    %1678 = vmatpush2.bf16.msra.mxu0 0
    %1679 = vmatprep.subr.bf16.mxu0 0
    %1680 = vmatpush2.bf16.msra.mxu0 0
    %1681 = vmatprep.subr.bf16.mxu0 0
    %1682 = vmatpush2.bf16.msra.mxu0 0
    %1683 = vmatprep.subr.bf16.mxu0 0
    %1684 = vmatpush2.bf16.msra.mxu0 0
    %1685 = vmatprep.subr.bf16.mxu0 0
    %1686 = vmatpush2.bf16.msra.mxu0 0
    %1687 = vmatprep.subr.bf16.mxu0 0
    %1688 = vmatpush2.bf16.msra.mxu0 0
    %1689 = vmatprep.subr.bf16.mxu0 0
    %1690 = vmatpush2.bf16.msra.mxu0 0
    %1691 = vmatprep.mubr.bf16.mxu0 0
    %1692 = vmatmul.mubr.bf16.gmra.mxu0 %v1168
    %v1693 = vpop.f32.mrf.mxu0
    %v1694 = vadd.f32 %v1197, %v1693
    %v1695 = vpop.f32.mrf.mxu0
    %v1696 = vadd.f32 %v1201, %v1695
    %v1697 = vpop.f32.mrf.mxu0
    %v1698 = vadd.f32 %v1197, %v1697
    %v1699 = vpop.f32.mrf.mxu0
    %v1700 = vadd.f32 %v1201, %v1699
    %1701 = vdwg.mxu0
    %v1702 = vmul.f32 %v1565, 1.442695
    %v1703 = vpow.pop %v1702
    %v1704 = vmul.f32 %v1567, 1.442695
    %v1705 = vpow.pop %v1704
    %v1706 = vmul.f32 %v1608, 1.442695
    %v1707 = vpow.pop %v1706
    %v1708 = vmul.f32 %v1610, 1.442695
    %v1709 = vpow.pop %v1708
    %v1710 = vmul.f32 %v1651, 1.442695
    %v1711 = vpow.pop %v1710
    %v1712 = vmul.f32 %v1653, 1.442695
    %v1713 = vpow.pop %v1712
    %v1714 = vmul.f32 %v1694, 1.442695
    %v1715 = vpow.pop %v1714
    %v1716 = vmul.f32 %v1696, 1.442695
    %v1717 = vpow.pop %v1716
    %v1718 = vmul.f32 %v1569, 1.442695
    %v1719 = vpow.pop %v1718
    %v1720 = vmul.f32 %v1571, 1.442695
    %v1721 = vpow.pop %v1720
    %v1722 = vmul.f32 %v1612, 1.442695
    %v1723 = vpow.pop %v1722
    %v1724 = vmul.f32 %v1614, 1.442695
    %v1725 = vpow.pop %v1724
    %v1726 = vmul.f32 %v1655, 1.442695
    %v1727 = vpow.pop %v1726
    %v1728 = vmul.f32 %v1657, 1.442695
    %v1729 = vpow.pop %v1728
    %v1730 = vmul.f32 %v1698, 1.442695
    %v1731 = vpow.pop %v1730
    %v1732 = vmul.f32 %v1700, 1.442695
    %v1733 = vpow.pop %v1732
    %1734 = vst [vmem:[%s9] sm:$0xff] %v1703
    %1735 = vst [vmem:[%s9 + $0x8] sm:$0xff] %v1705
    %1736 = vst [vmem:[%s9 + $0x10] sm:$0xff] %v1707
    %1737 = vst [vmem:[%s9 + $0x18] sm:$0xff] %v1709
    %1738 = vst [vmem:[%s9 + $0x20] sm:$0xff] %v1711
    %1739 = vst [vmem:[%s9 + $0x28] sm:$0xff] %v1713
    %1740 = vst [vmem:[%s9 + $0x30] sm:$0xff] %v1715
    %1741 = vst [vmem:[%s9 + $0x38] sm:$0xff] %v1717
    %1742 = vst [vmem:[%s9 + $0x40] sm:$0xff] %v1719
    %1743 = vst [vmem:[%s9 + $0x48] sm:$0xff] %v1721
    %1744 = vst [vmem:[%s9 + $0x50] sm:$0xff] %v1723
    %1745 = vst [vmem:[%s9 + $0x58] sm:$0xff] %v1725
    %1746 = vst [vmem:[%s9 + $0x60] sm:$0xff] %v1727
    %1747 = vst [vmem:[%s9 + $0x68] sm:$0xff] %v1729
    %1748 = vst [vmem:[%s9 + $0x70] sm:$0xff] %v1731
    %1749 = vst [vmem:[%s9 + $0x78] sm:$0xff] %v1733
    %1750 = vst [vmem:[%s10] sm:$0xff] %v986
    %1751 = vst [vmem:[%s10 + $0x8] sm:$0xff] %v987
    // Predicated region
    $region50: #{fused_forward.1} parent=1 // pred_check
      _
    $region51: #{fused_forward.1} parent=1 // pred_check_branch
      %1753 = sbr.rel (0) target = $region53
    $region52: #{fused_forward.1} parent=1 // pred_region
      _
    $region53: #{fused_forward.1} parent=1 // pred_fallthru
      _
    // Predicated region
    $region54: #{fused_forward.1} parent=1 // pred_check
      _
    $region55: #{fused_forward.1} parent=1 // pred_check_branch
      %1755 = sbr.rel (0) target = $region57
    $region56: #{fused_forward.1} parent=1 // pred_region
      _
    $region57: #{fused_forward.1} parent=1 // pred_fallthru
      _
    // Predicated region
    $region58: #{fused_forward.1} parent=1 // pred_check
      _
    $region59: #{fused_forward.1} parent=1 // pred_check_branch
      %1757 = sbr.rel (0) target = $region61
    $region60: #{fused_forward.1} parent=1 // pred_region
      _
    $region61: #{fused_forward.1} parent=1 // pred_fallthru
      _
    // Predicated region
    $region62: #{fused_forward.1} parent=1 // pred_check
      _
    $region63: #{fused_forward.1} parent=1 // pred_check_branch
      %1759 = sbr.rel (0) target = $region65
    $region64: #{fused_forward.1} parent=1 // pred_region
      _
    $region65: #{fused_forward.1} parent=1 // pred_fallthru
      _
    %1760 = vsyncpa [#allocation3], 1
    %1761 = vsyncpa [#allocation5], 1

</llo_original>
